<compile_context>
chip_gen: v7x
topology: tpu7x:2x2x1
jax: 0.10.0
libtpu: 0.0.40
codegen_flags: <defaults>
</compile_context>

<pallas_src>
import jax
import jax.numpy as jnp
from jax.experimental import pallas as pl
from jax.experimental.pallas import tpu as pltpu

HID_DIM = 32
N_HEADS = 4
HEAD_DIM = HID_DIM // N_HEADS
PF_DIM = 64
EPS = 1e-5  # nn.LayerNorm default


def _layernorm(x, gamma, beta):
    mu = jnp.mean(x, axis=-1, keepdims=True)
    var = jnp.mean((x - mu) ** 2, axis=-1, keepdims=True)
    return (x - mu) * jax.lax.rsqrt(var + EPS) * gamma + beta


def decoder_layer_kernel(x_ref, bias_ref,
                         wqkv_ref, bqkv_ref, wo_ref, bo_ref,
                         ga_ref, ba_ref,          # norm_maskedatt (gamma, beta)
                         w1_ref, b1_ref, w2_ref, b2_ref,
                         gf_ref, bf_ref,          # norm_ff (gamma, beta)
                         out_ref):
    Bt, S, _ = bias_ref.shape
    H = HID_DIM

    x = x_ref[...]                                           # (Bt*S, H)

    # Fused QKV projection; 1/sqrt(head_dim) already folded into the Q slice
    # of wqkv/bqkv by the wrapper.
    qkv = jnp.dot(x, wqkv_ref[...],
                  preferred_element_type=jnp.float32) + bqkv_ref[...]
    q = qkv[:, 0 * H:1 * H].reshape(Bt, S, H)
    k = qkv[:, 1 * H:2 * H].reshape(Bt, S, H)
    v = qkv[:, 2 * H:3 * H].reshape(Bt, S, H)

    bias = bias_ref[...]                                     # (Bt, S, S) additive
    wo = wo_ref[...]                                         # (H, H)

    # Masked multi-head attention, batched over the whole batch tile.
    # Per-head result is pushed straight through the matching slice of wo
    # (no head-concat / cross-lane shuffles), accumulated in registers.
    acc = jnp.zeros((Bt * S, H), jnp.float32)
    for h in range(N_HEADS):
        cols = slice(h * HEAD_DIM, (h + 1) * HEAD_DIM)
        qh = q[:, :, cols]                                   # (Bt, S, hd)
        kh = k[:, :, cols]
        vh = v[:, :, cols]
        e = jnp.einsum('bqd,bkd->bqk', qh, kh,
                       preferred_element_type=jnp.float32) + bias
        m = jnp.max(e, axis=-1, keepdims=True)
        p = jnp.exp(e - m)
        inv = pl.reciprocal(jnp.sum(p, axis=-1, keepdims=True), approx=True)
        o = jnp.einsum('bqk,bkd->bqd', p * inv, vh,
                       preferred_element_type=jnp.float32)   # (Bt, S, hd)
        acc = acc + jnp.dot(o.reshape(Bt * S, HEAD_DIM), wo[cols, :],
                            preferred_element_type=jnp.float32)

    # residual + LayerNorm (dropout == identity), on the flat (Bt*S, H) slab
    x1 = _layernorm(x + acc + bo_ref[...], ga_ref[...], ba_ref[...])

    # Positionwise feed-forward: fc2(relu(fc1(x)))
    h1 = jnp.maximum(
        jnp.dot(x1, w1_ref[...], preferred_element_type=jnp.float32) + b1_ref[...],
        0.0)
    ff = jnp.dot(h1, w2_ref[...], preferred_element_type=jnp.float32) + b2_ref[...]

    # residual + LayerNorm
    out_ref[...] = _layernorm(x1 + ff, gf_ref[...], bf_ref[...])


def decoder_layer(trg, trg_mask, params, *, block_b=8):
    """trg: (B, S, H) f32, trg_mask: (B, 1, S, S) int. Returns (B, S, H) f32."""
    B, S, H = trg.shape
    assert H == HID_DIM and trg_mask.shape == (B, 1, S, S)

    Bt = min(block_b, B)
    n_blocks = -(-B // Bt)
    Bp = n_blocks * Bt

    inv_scale = 1.0 / (float(HEAD_DIM) ** 0.5)
    # Fuse q/k/v projections; fold the attention scale into the Q columns.
    wqkv = jnp.concatenate(
        [params["wq"] * inv_scale, params["wk"], params["wv"]], axis=1)   # (H, 3H)
    bqkv = jnp.concatenate(
        [params["bq"] * inv_scale, params["bk"], params["bv"]], axis=1)   # (1, 3H)

    # Additive attention-mask bias: 0 where visible, -1e10 where masked.
    bias = jnp.where(trg_mask == 0, jnp.float32(-1e10), jnp.float32(0.0))
    bias = bias.reshape(B, S, S)

    x = trg
    if Bp != B:  # pad batch to a multiple of the batch tile (discarded later)
        x = jnp.concatenate([x, jnp.zeros((Bp - B, S, H), x.dtype)], axis=0)
        bias = jnp.concatenate(
            [bias, jnp.zeros((Bp - B, S, S), bias.dtype)], axis=0)
    x_flat = x.reshape(Bp * S, H)

    param_list = [
        wqkv, bqkv, params["wo"], params["bo"],
        params["ga"], params["ba"],
        params["w1"], params["b1"], params["w2"], params["b2"],
        params["gf"], params["bf"],
    ]

    def full_spec(shape):
        return pl.BlockSpec(shape, lambda i, _n=len(shape): (0,) * _n)

    in_specs = [
        pl.BlockSpec((Bt * S, H), lambda i: (i, 0)),
        pl.BlockSpec((Bt, S, S), lambda i: (i, 0, 0)),
    ] + [full_spec(p.shape) for p in param_list]

    out_specs = pl.BlockSpec((Bt * S, H), lambda i: (i, 0))

    out_flat = pl.pallas_call(
        decoder_layer_kernel,
        out_shape=jax.ShapeDtypeStruct((Bp * S, H), jnp.float32),
        grid_spec=pltpu.PrefetchScalarGridSpec(
            num_scalar_prefetch=0,
            grid=(n_blocks,),
            in_specs=in_specs,
            out_specs=out_specs,
        ),
        compiler_params=pltpu.CompilerParams(
            dimension_semantics=("parallel",)),
    )(x_flat, bias, *param_list)

    return out_flat.reshape(Bp, S, H)[:B]


def make_params(key):
    """Deterministic synthetic parameters (weights stored already transposed)."""
    ks = jax.random.split(key, 8)
    std = 0.1
    p = {
        # attention projections: (H, H) = W.T of the PyTorch (out, in) weight
        "wq": jax.random.normal(ks[0], (HID_DIM, HID_DIM), jnp.float32) * std,
        "bq": jax.random.normal(ks[1], (1, HID_DIM), jnp.float32) * std,
        "wk": jax.random.normal(ks[2], (HID_DIM, HID_DIM), jnp.float32) * std,
        "bk": jax.random.normal(ks[3], (1, HID_DIM), jnp.float32) * std,
        "wv": jax.random.normal(ks[4], (HID_DIM, HID_DIM), jnp.float32) * std,
        "bv": jax.random.normal(ks[5], (1, HID_DIM), jnp.float32) * std,
        "wo": jax.random.normal(ks[6], (HID_DIM, HID_DIM), jnp.float32) * std,
        "bo": jax.random.normal(ks[7], (1, HID_DIM), jnp.float32) * std,
        # norm_maskedatt
        "ga": jnp.ones((1, HID_DIM), jnp.float32),
        "ba": jnp.zeros((1, HID_DIM), jnp.float32),
        # feed-forward
        "w1": jax.random.normal(jax.random.fold_in(key, 100),
                                (HID_DIM, PF_DIM), jnp.float32) * std,
        "b1": jax.random.normal(jax.random.fold_in(key, 101),
                                (1, PF_DIM), jnp.float32) * std,
        "w2": jax.random.normal(jax.random.fold_in(key, 102),
                                (PF_DIM, HID_DIM), jnp.float32) * std,
        "b2": jax.random.normal(jax.random.fold_in(key, 103),
                                (1, HID_DIM), jnp.float32) * std,
        # norm_ff
        "gf": jnp.ones((1, HID_DIM), jnp.float32),
        "bf": jnp.zeros((1, HID_DIM), jnp.float32),
    }
    return p


def decoder_layer_ref(trg, trg_mask, p):
    """Pure-JAX reference mirroring the PyTorch forward (dropout = identity)."""
    B, S, H = trg.shape
    q = trg @ p["wq"] + p["bq"]
    k = trg @ p["wk"] + p["bk"]
    v = trg @ p["wv"] + p["bv"]

    def split(x):  # (B,S,H) -> (B,nh,S,hd)
        return x.reshape(B, S, N_HEADS, HEAD_DIM).transpose(0, 2, 1, 3)

    Q, K, V = split(q), split(k), split(v)
    e = jnp.einsum("bhqd,bhkd->bhqk", Q, K) / jnp.sqrt(jnp.float32(HEAD_DIM))
    e = jnp.where(trg_mask == 0, -1e10, e)
    a = jax.nn.softmax(e, axis=-1)
    x = jnp.einsum("bhqk,bhkd->bhqd", a, V).transpose(0, 2, 1, 3).reshape(B, S, H)
    x = x @ p["wo"] + p["bo"]
    x1 = _layernorm(trg + x, p["ga"], p["ba"])
    ff = jnp.maximum(x1 @ p["w1"] + p["b1"], 0.0) @ p["w2"] + p["b2"]
    return _layernorm(x1 + ff, p["gf"], p["bf"])


if __name__ == "__main__":
    B, S = 2, 8
    key = jax.random.PRNGKey(0)
    k_x, k_p = jax.random.split(key)

    trg = jax.random.normal(k_x, (B, S, HID_DIM), jnp.float32)
    # causal (subsequent) mask, broadcast over heads: (B, 1, S, S)
    causal = jnp.tril(jnp.ones((S, S), jnp.int32))
    trg_mask = jnp.broadcast_to(causal, (B, 1, S, S))

    params = make_params(k_p)

    out = decoder_layer(trg, trg_mask, params)
    out = jax.block_until_ready(out)

    ref = decoder_layer_ref(trg, trg_mask, params)
    assert out.shape == (B, S, HID_DIM)
    # slightly relaxed tolerance for the EUP approx-reciprocal softmax denom
    assert jnp.allclose(out, ref, rtol=2e-3, atol=2e-3), (
        float(jnp.max(jnp.abs(out - ref))))

    print("KERNEL_OK")
</pallas_src>

<mosaic_0001>
module attributes {stable_mosaic.version = 11 : i64} {
  func.func @decoder_layer_kernel(%arg0: i32, %arg1: memref<16x32xf32, #tpu.memory_space<vmem>>, %arg2: memref<2x8x8xf32, #tpu.memory_space<vmem>>, %arg3: memref<32x96xf32, #tpu.memory_space<vmem>>, %arg4: memref<1x96xf32, #tpu.memory_space<vmem>>, %arg5: memref<32x32xf32, #tpu.memory_space<vmem>>, %arg6: memref<1x32xf32, #tpu.memory_space<vmem>>, %arg7: memref<1x32xf32, #tpu.memory_space<vmem>>, %arg8: memref<1x32xf32, #tpu.memory_space<vmem>>, %arg9: memref<32x64xf32, #tpu.memory_space<vmem>>, %arg10: memref<1x64xf32, #tpu.memory_space<vmem>>, %arg11: memref<64x32xf32, #tpu.memory_space<vmem>>, %arg12: memref<1x32xf32, #tpu.memory_space<vmem>>, %arg13: memref<1x32xf32, #tpu.memory_space<vmem>>, %arg14: memref<1x32xf32, #tpu.memory_space<vmem>>, %arg15: memref<16x32xf32, #tpu.memory_space<vmem>>) attributes {dimension_semantics = [#tpu.dimension_semantics<parallel>], iteration_bounds = array<i64: 1>, scalar_prefetch = 0 : i64, scratch_operands = 0 : i64, tpu.core_type = #tpu.core_type<tc>, window_params = [{transform_indices = @transform_0, window_bounds = array<i64: 16, 32>}, {transform_indices = @transform_1, window_bounds = array<i64: 2, 8, 8>}, {pipeline_mode = #tpu.pipeline_mode<synchronous>, transform_indices = @transform_2, window_bounds = array<i64: 32, 96>}, {pipeline_mode = #tpu.pipeline_mode<synchronous>, transform_indices = @transform_3, window_bounds = array<i64: 1, 96>}, {pipeline_mode = #tpu.pipeline_mode<synchronous>, transform_indices = @transform_4, window_bounds = array<i64: 32, 32>}, {pipeline_mode = #tpu.pipeline_mode<synchronous>, transform_indices = @transform_5, window_bounds = array<i64: 1, 32>}, {pipeline_mode = #tpu.pipeline_mode<synchronous>, transform_indices = @transform_6, window_bounds = array<i64: 1, 32>}, {pipeline_mode = #tpu.pipeline_mode<synchronous>, transform_indices = @transform_7, window_bounds = array<i64: 1, 32>}, {pipeline_mode = #tpu.pipeline_mode<synchronous>, transform_indices = @transform_8, window_bounds = array<i64: 32, 64>}, {pipeline_mode = #tpu.pipeline_mode<synchronous>, transform_indices = @transform_9, window_bounds = array<i64: 1, 64>}, {pipeline_mode = #tpu.pipeline_mode<synchronous>, transform_indices = @transform_10, window_bounds = array<i64: 64, 32>}, {pipeline_mode = #tpu.pipeline_mode<synchronous>, transform_indices = @transform_11, window_bounds = array<i64: 1, 32>}, {pipeline_mode = #tpu.pipeline_mode<synchronous>, transform_indices = @transform_12, window_bounds = array<i64: 1, 32>}, {pipeline_mode = #tpu.pipeline_mode<synchronous>, transform_indices = @transform_13, window_bounds = array<i64: 1, 32>}, {transform_indices = @transform_14, window_bounds = array<i64: 16, 32>}]} {
    %c0 = arith.constant 0 : index
    %c0_0 = arith.constant 0 : index
    %0 = vector.load %arg1[%c0, %c0_0] : memref<16x32xf32, #tpu.memory_space<vmem>>, vector<16x32xf32>
    %c0_1 = arith.constant 0 : index
    %c0_2 = arith.constant 0 : index
    %1 = vector.load %arg3[%c0_1, %c0_2] : memref<32x96xf32, #tpu.memory_space<vmem>>, vector<32x96xf32>
    %cst = arith.constant dense<0.000000e+00> : vector<16x96xf32>
    %2 = tpu.matmul %0, %1, %cst {dimension_numbers = #tpu.dot_dimension_numbers<[1], [0], [0], [1], [0, 0, 1, 1], [], []>} : vector<16x32xf32>, vector<32x96xf32>, vector<16x96xf32> -> vector<16x96xf32>
    %c0_3 = arith.constant 0 : index
    %c0_4 = arith.constant 0 : index
    %3 = vector.load %arg4[%c0_3, %c0_4] : memref<1x96xf32, #tpu.memory_space<vmem>>, vector<1x96xf32>
    %4 = vector.broadcast %3 : vector<1x96xf32> to vector<16x96xf32>
    %5 = arith.addf %2, %4 : vector<16x96xf32>
    %6 = vector.extract_strided_slice %5 {offsets = [0, 0], sizes = [16, 32], strides = [1, 1]} : vector<16x96xf32> to vector<16x32xf32>
    %7 = vector.shape_cast %6 : vector<16x32xf32> to vector<2x8x32xf32>
    %8 = vector.extract_strided_slice %5 {offsets = [0, 32], sizes = [16, 32], strides = [1, 1]} : vector<16x96xf32> to vector<16x32xf32>
    %9 = vector.shape_cast %8 : vector<16x32xf32> to vector<2x8x32xf32>
    %10 = vector.extract_strided_slice %5 {offsets = [0, 64], sizes = [16, 32], strides = [1, 1]} : vector<16x96xf32> to vector<16x32xf32>
    %11 = vector.shape_cast %10 : vector<16x32xf32> to vector<2x8x32xf32>
    %c0_5 = arith.constant 0 : index
    %c0_6 = arith.constant 0 : index
    %c0_7 = arith.constant 0 : index
    %12 = vector.load %arg2[%c0_5, %c0_6, %c0_7] : memref<2x8x8xf32, #tpu.memory_space<vmem>>, vector<2x8x8xf32>
    %c0_8 = arith.constant 0 : index
    %c0_9 = arith.constant 0 : index
    %13 = vector.load %arg5[%c0_8, %c0_9] : memref<32x32xf32, #tpu.memory_space<vmem>>, vector<32x32xf32>
    %cst_10 = arith.constant 0.000000e+00 : f32
    %14 = vector.broadcast %cst_10 : f32 to vector<16x32xf32>
    %15 = vector.extract_strided_slice %7 {offsets = [0, 0, 0], sizes = [2, 8, 8], strides = [1, 1, 1]} : vector<2x8x32xf32> to vector<2x8x8xf32>
    %16 = vector.extract_strided_slice %9 {offsets = [0, 0, 0], sizes = [2, 8, 8], strides = [1, 1, 1]} : vector<2x8x32xf32> to vector<2x8x8xf32>
    %17 = vector.extract_strided_slice %11 {offsets = [0, 0, 0], sizes = [2, 8, 8], strides = [1, 1, 1]} : vector<2x8x32xf32> to vector<2x8x8xf32>
    "tpu.trace_start"() <{level = 10 : i32, message = "bqd,bkd->bqk"}> : () -> ()
    %cst_11 = arith.constant dense<0.000000e+00> : vector<2x8x8xf32>
    %18 = tpu.matmul %15, %16, %cst_11 {dimension_numbers = #tpu.dot_dimension_numbers<[2], [2], [1], [1], [0, 0, 0, 1, 1, 1], [0], [0]>} : vector<2x8x8xf32>, vector<2x8x8xf32>, vector<2x8x8xf32> -> vector<2x8x8xf32>
    "tpu.trace_stop"() : () -> ()
    %19 = arith.addf %18, %12 : vector<2x8x8xf32>
    %cst_12 = arith.constant dense<0xFF800000> : vector<2x8xf32>
    %20 = vector.multi_reduction <maximumf>, %19, %cst_12 [2] : vector<2x8x8xf32> to vector<2x8xf32>
    %21 = vector.shape_cast %20 : vector<2x8xf32> to vector<2x8x1xf32>
    %22 = vector.broadcast %21 : vector<2x8x1xf32> to vector<2x8x8xf32>
    %23 = arith.subf %19, %22 : vector<2x8x8xf32>
    %24 = math.exp %23 : vector<2x8x8xf32>
    %cst_13 = arith.constant dense<0.000000e+00> : vector<2x8xf32>
    %25 = vector.multi_reduction <add>, %24, %cst_13 [2] : vector<2x8x8xf32> to vector<2x8xf32>
    %26 = vector.shape_cast %25 : vector<2x8xf32> to vector<2x8x1xf32>
    %27 = tpu.reciprocal %26 {approx = true} : vector<2x8x1xf32> -> vector<2x8x1xf32>
    %28 = vector.broadcast %27 : vector<2x8x1xf32> to vector<2x8x8xf32>
    %29 = arith.mulf %24, %28 : vector<2x8x8xf32>
    "tpu.trace_start"() <{level = 10 : i32, message = "bqk,bkd->bqd"}> : () -> ()
    %cst_14 = arith.constant dense<0.000000e+00> : vector<2x8x8xf32>
    %30 = tpu.matmul %29, %17, %cst_14 {dimension_numbers = #tpu.dot_dimension_numbers<[2], [1], [1], [2], [0, 0, 0, 1, 1, 2], [0], [0]>} : vector<2x8x8xf32>, vector<2x8x8xf32>, vector<2x8x8xf32> -> vector<2x8x8xf32>
    "tpu.trace_stop"() : () -> ()
    %31 = vector.shape_cast %30 : vector<2x8x8xf32> to vector<16x8xf32>
    %32 = vector.extract_strided_slice %13 {offsets = [0, 0], sizes = [8, 32], strides = [1, 1]} : vector<32x32xf32> to vector<8x32xf32>
    %cst_15 = arith.constant dense<0.000000e+00> : vector<16x32xf32>
    %33 = tpu.matmul %31, %32, %cst_15 {dimension_numbers = #tpu.dot_dimension_numbers<[1], [0], [0], [1], [0, 0, 1, 1], [], []>} : vector<16x8xf32>, vector<8x32xf32>, vector<16x32xf32> -> vector<16x32xf32>
    %34 = arith.addf %14, %33 : vector<16x32xf32>
    %35 = vector.extract_strided_slice %7 {offsets = [0, 0, 8], sizes = [2, 8, 8], strides = [1, 1, 1]} : vector<2x8x32xf32> to vector<2x8x8xf32>
    %36 = vector.extract_strided_slice %9 {offsets = [0, 0, 8], sizes = [2, 8, 8], strides = [1, 1, 1]} : vector<2x8x32xf32> to vector<2x8x8xf32>
    %37 = vector.extract_strided_slice %11 {offsets = [0, 0, 8], sizes = [2, 8, 8], strides = [1, 1, 1]} : vector<2x8x32xf32> to vector<2x8x8xf32>
    "tpu.trace_start"() <{level = 10 : i32, message = "bqd,bkd->bqk"}> : () -> ()
    %cst_16 = arith.constant dense<0.000000e+00> : vector<2x8x8xf32>
    %38 = tpu.matmul %35, %36, %cst_16 {dimension_numbers = #tpu.dot_dimension_numbers<[2], [2], [1], [1], [0, 0, 0, 1, 1, 1], [0], [0]>} : vector<2x8x8xf32>, vector<2x8x8xf32>, vector<2x8x8xf32> -> vector<2x8x8xf32>
    "tpu.trace_stop"() : () -> ()
    %39 = arith.addf %38, %12 : vector<2x8x8xf32>
    %cst_17 = arith.constant dense<0xFF800000> : vector<2x8xf32>
    %40 = vector.multi_reduction <maximumf>, %39, %cst_17 [2] : vector<2x8x8xf32> to vector<2x8xf32>
    %41 = vector.shape_cast %40 : vector<2x8xf32> to vector<2x8x1xf32>
    %42 = vector.broadcast %41 : vector<2x8x1xf32> to vector<2x8x8xf32>
    %43 = arith.subf %39, %42 : vector<2x8x8xf32>
    %44 = math.exp %43 : vector<2x8x8xf32>
    %cst_18 = arith.constant dense<0.000000e+00> : vector<2x8xf32>
    %45 = vector.multi_reduction <add>, %44, %cst_18 [2] : vector<2x8x8xf32> to vector<2x8xf32>
    %46 = vector.shape_cast %45 : vector<2x8xf32> to vector<2x8x1xf32>
    %47 = tpu.reciprocal %46 {approx = true} : vector<2x8x1xf32> -> vector<2x8x1xf32>
    %48 = vector.broadcast %47 : vector<2x8x1xf32> to vector<2x8x8xf32>
    %49 = arith.mulf %44, %48 : vector<2x8x8xf32>
    "tpu.trace_start"() <{level = 10 : i32, message = "bqk,bkd->bqd"}> : () -> ()
    %cst_19 = arith.constant dense<0.000000e+00> : vector<2x8x8xf32>
    %50 = tpu.matmul %49, %37, %cst_19 {dimension_numbers = #tpu.dot_dimension_numbers<[2], [1], [1], [2], [0, 0, 0, 1, 1, 2], [0], [0]>} : vector<2x8x8xf32>, vector<2x8x8xf32>, vector<2x8x8xf32> -> vector<2x8x8xf32>
    "tpu.trace_stop"() : () -> ()
    %51 = vector.shape_cast %50 : vector<2x8x8xf32> to vector<16x8xf32>
    %52 = vector.extract_strided_slice %13 {offsets = [8, 0], sizes = [8, 32], strides = [1, 1]} : vector<32x32xf32> to vector<8x32xf32>
    %cst_20 = arith.constant dense<0.000000e+00> : vector<16x32xf32>
    %53 = tpu.matmul %51, %52, %cst_20 {dimension_numbers = #tpu.dot_dimension_numbers<[1], [0], [0], [1], [0, 0, 1, 1], [], []>} : vector<16x8xf32>, vector<8x32xf32>, vector<16x32xf32> -> vector<16x32xf32>
    %54 = arith.addf %34, %53 : vector<16x32xf32>
    %55 = vector.extract_strided_slice %7 {offsets = [0, 0, 16], sizes = [2, 8, 8], strides = [1, 1, 1]} : vector<2x8x32xf32> to vector<2x8x8xf32>
    %56 = vector.extract_strided_slice %9 {offsets = [0, 0, 16], sizes = [2, 8, 8], strides = [1, 1, 1]} : vector<2x8x32xf32> to vector<2x8x8xf32>
    %57 = vector.extract_strided_slice %11 {offsets = [0, 0, 16], sizes = [2, 8, 8], strides = [1, 1, 1]} : vector<2x8x32xf32> to vector<2x8x8xf32>
    "tpu.trace_start"() <{level = 10 : i32, message = "bqd,bkd->bqk"}> : () -> ()
    %cst_21 = arith.constant dense<0.000000e+00> : vector<2x8x8xf32>
    %58 = tpu.matmul %55, %56, %cst_21 {dimension_numbers = #tpu.dot_dimension_numbers<[2], [2], [1], [1], [0, 0, 0, 1, 1, 1], [0], [0]>} : vector<2x8x8xf32>, vector<2x8x8xf32>, vector<2x8x8xf32> -> vector<2x8x8xf32>
    "tpu.trace_stop"() : () -> ()
    %59 = arith.addf %58, %12 : vector<2x8x8xf32>
    %cst_22 = arith.constant dense<0xFF800000> : vector<2x8xf32>
    %60 = vector.multi_reduction <maximumf>, %59, %cst_22 [2] : vector<2x8x8xf32> to vector<2x8xf32>
    %61 = vector.shape_cast %60 : vector<2x8xf32> to vector<2x8x1xf32>
    %62 = vector.broadcast %61 : vector<2x8x1xf32> to vector<2x8x8xf32>
    %63 = arith.subf %59, %62 : vector<2x8x8xf32>
    %64 = math.exp %63 : vector<2x8x8xf32>
    %cst_23 = arith.constant dense<0.000000e+00> : vector<2x8xf32>
    %65 = vector.multi_reduction <add>, %64, %cst_23 [2] : vector<2x8x8xf32> to vector<2x8xf32>
    %66 = vector.shape_cast %65 : vector<2x8xf32> to vector<2x8x1xf32>
    %67 = tpu.reciprocal %66 {approx = true} : vector<2x8x1xf32> -> vector<2x8x1xf32>
    %68 = vector.broadcast %67 : vector<2x8x1xf32> to vector<2x8x8xf32>
    %69 = arith.mulf %64, %68 : vector<2x8x8xf32>
    "tpu.trace_start"() <{level = 10 : i32, message = "bqk,bkd->bqd"}> : () -> ()
    %cst_24 = arith.constant dense<0.000000e+00> : vector<2x8x8xf32>
    %70 = tpu.matmul %69, %57, %cst_24 {dimension_numbers = #tpu.dot_dimension_numbers<[2], [1], [1], [2], [0, 0, 0, 1, 1, 2], [0], [0]>} : vector<2x8x8xf32>, vector<2x8x8xf32>, vector<2x8x8xf32> -> vector<2x8x8xf32>
    "tpu.trace_stop"() : () -> ()
    %71 = vector.shape_cast %70 : vector<2x8x8xf32> to vector<16x8xf32>
    %72 = vector.extract_strided_slice %13 {offsets = [16, 0], sizes = [8, 32], strides = [1, 1]} : vector<32x32xf32> to vector<8x32xf32>
    %cst_25 = arith.constant dense<0.000000e+00> : vector<16x32xf32>
    %73 = tpu.matmul %71, %72, %cst_25 {dimension_numbers = #tpu.dot_dimension_numbers<[1], [0], [0], [1], [0, 0, 1, 1], [], []>} : vector<16x8xf32>, vector<8x32xf32>, vector<16x32xf32> -> vector<16x32xf32>
    %74 = arith.addf %54, %73 : vector<16x32xf32>
    %75 = vector.extract_strided_slice %7 {offsets = [0, 0, 24], sizes = [2, 8, 8], strides = [1, 1, 1]} : vector<2x8x32xf32> to vector<2x8x8xf32>
    %76 = vector.extract_strided_slice %9 {offsets = [0, 0, 24], sizes = [2, 8, 8], strides = [1, 1, 1]} : vector<2x8x32xf32> to vector<2x8x8xf32>
    %77 = vector.extract_strided_slice %11 {offsets = [0, 0, 24], sizes = [2, 8, 8], strides = [1, 1, 1]} : vector<2x8x32xf32> to vector<2x8x8xf32>
    "tpu.trace_start"() <{level = 10 : i32, message = "bqd,bkd->bqk"}> : () -> ()
    %cst_26 = arith.constant dense<0.000000e+00> : vector<2x8x8xf32>
    %78 = tpu.matmul %75, %76, %cst_26 {dimension_numbers = #tpu.dot_dimension_numbers<[2], [2], [1], [1], [0, 0, 0, 1, 1, 1], [0], [0]>} : vector<2x8x8xf32>, vector<2x8x8xf32>, vector<2x8x8xf32> -> vector<2x8x8xf32>
    "tpu.trace_stop"() : () -> ()
    %79 = arith.addf %78, %12 : vector<2x8x8xf32>
    %cst_27 = arith.constant dense<0xFF800000> : vector<2x8xf32>
    %80 = vector.multi_reduction <maximumf>, %79, %cst_27 [2] : vector<2x8x8xf32> to vector<2x8xf32>
    %81 = vector.shape_cast %80 : vector<2x8xf32> to vector<2x8x1xf32>
    %82 = vector.broadcast %81 : vector<2x8x1xf32> to vector<2x8x8xf32>
    %83 = arith.subf %79, %82 : vector<2x8x8xf32>
    %84 = math.exp %83 : vector<2x8x8xf32>
    %cst_28 = arith.constant dense<0.000000e+00> : vector<2x8xf32>
    %85 = vector.multi_reduction <add>, %84, %cst_28 [2] : vector<2x8x8xf32> to vector<2x8xf32>
    %86 = vector.shape_cast %85 : vector<2x8xf32> to vector<2x8x1xf32>
    %87 = tpu.reciprocal %86 {approx = true} : vector<2x8x1xf32> -> vector<2x8x1xf32>
    %88 = vector.broadcast %87 : vector<2x8x1xf32> to vector<2x8x8xf32>
    %89 = arith.mulf %84, %88 : vector<2x8x8xf32>
    "tpu.trace_start"() <{level = 10 : i32, message = "bqk,bkd->bqd"}> : () -> ()
    %cst_29 = arith.constant dense<0.000000e+00> : vector<2x8x8xf32>
    %90 = tpu.matmul %89, %77, %cst_29 {dimension_numbers = #tpu.dot_dimension_numbers<[2], [1], [1], [2], [0, 0, 0, 1, 1, 2], [0], [0]>} : vector<2x8x8xf32>, vector<2x8x8xf32>, vector<2x8x8xf32> -> vector<2x8x8xf32>
    "tpu.trace_stop"() : () -> ()
    %91 = vector.shape_cast %90 : vector<2x8x8xf32> to vector<16x8xf32>
    %92 = vector.extract_strided_slice %13 {offsets = [24, 0], sizes = [8, 32], strides = [1, 1]} : vector<32x32xf32> to vector<8x32xf32>
    %cst_30 = arith.constant dense<0.000000e+00> : vector<16x32xf32>
    %93 = tpu.matmul %91, %92, %cst_30 {dimension_numbers = #tpu.dot_dimension_numbers<[1], [0], [0], [1], [0, 0, 1, 1], [], []>} : vector<16x8xf32>, vector<8x32xf32>, vector<16x32xf32> -> vector<16x32xf32>
    %94 = arith.addf %74, %93 : vector<16x32xf32>
    %95 = arith.addf %0, %94 : vector<16x32xf32>
    %c0_31 = arith.constant 0 : index
    %c0_32 = arith.constant 0 : index
    %96 = vector.load %arg6[%c0_31, %c0_32] : memref<1x32xf32, #tpu.memory_space<vmem>>, vector<1x32xf32>
    %97 = vector.broadcast %96 : vector<1x32xf32> to vector<16x32xf32>
    %98 = arith.addf %95, %97 : vector<16x32xf32>
    %c0_33 = arith.constant 0 : index
    %c0_34 = arith.constant 0 : index
    %99 = vector.load %arg7[%c0_33, %c0_34] : memref<1x32xf32, #tpu.memory_space<vmem>>, vector<1x32xf32>
    %c0_35 = arith.constant 0 : index
    %c0_36 = arith.constant 0 : index
    %100 = vector.load %arg8[%c0_35, %c0_36] : memref<1x32xf32, #tpu.memory_space<vmem>>, vector<1x32xf32>
    %cst_37 = arith.constant dense<0.000000e+00> : vector<16xf32>
    %101 = vector.multi_reduction <add>, %98, %cst_37 [1] : vector<16x32xf32> to vector<16xf32>
    %102 = vector.shape_cast %101 : vector<16xf32> to vector<16x1xf32>
    %cst_38 = arith.constant 3.200000e+01 : f32
    %103 = vector.broadcast %cst_38 : f32 to vector<16x1xf32>
    %104 = arith.divf %102, %103 : vector<16x1xf32>
    %105 = vector.broadcast %104 : vector<16x1xf32> to vector<16x32xf32>
    %106 = arith.subf %98, %105 : vector<16x32xf32>
    %107 = arith.mulf %106, %106 : vector<16x32xf32>
    %cst_39 = arith.constant dense<0.000000e+00> : vector<16xf32>
    %108 = vector.multi_reduction <add>, %107, %cst_39 [1] : vector<16x32xf32> to vector<16xf32>
    %109 = vector.shape_cast %108 : vector<16xf32> to vector<16x1xf32>
    %cst_40 = arith.constant 3.200000e+01 : f32
    %110 = vector.broadcast %cst_40 : f32 to vector<16x1xf32>
    %111 = arith.divf %109, %110 : vector<16x1xf32>
    %112 = vector.broadcast %104 : vector<16x1xf32> to vector<16x32xf32>
    %113 = arith.subf %98, %112 : vector<16x32xf32>
    %cst_41 = arith.constant 9.99999974E-6 : f32
    %114 = vector.broadcast %cst_41 : f32 to vector<16x1xf32>
    %115 = arith.addf %111, %114 : vector<16x1xf32>
    %116 = math.rsqrt %115 : vector<16x1xf32>
    %117 = vector.broadcast %116 : vector<16x1xf32> to vector<16x32xf32>
    %118 = arith.mulf %113, %117 : vector<16x32xf32>
    %119 = vector.broadcast %99 : vector<1x32xf32> to vector<16x32xf32>
    %120 = arith.mulf %118, %119 : vector<16x32xf32>
    %121 = vector.broadcast %100 : vector<1x32xf32> to vector<16x32xf32>
    %122 = arith.addf %120, %121 : vector<16x32xf32>
    %c0_42 = arith.constant 0 : index
    %c0_43 = arith.constant 0 : index
    %123 = vector.load %arg9[%c0_42, %c0_43] : memref<32x64xf32, #tpu.memory_space<vmem>>, vector<32x64xf32>
    %cst_44 = arith.constant dense<0.000000e+00> : vector<16x64xf32>
    %124 = tpu.matmul %122, %123, %cst_44 {dimension_numbers = #tpu.dot_dimension_numbers<[1], [0], [0], [1], [0, 0, 1, 1], [], []>} : vector<16x32xf32>, vector<32x64xf32>, vector<16x64xf32> -> vector<16x64xf32>
    %c0_45 = arith.constant 0 : index
    %c0_46 = arith.constant 0 : index
    %125 = vector.load %arg10[%c0_45, %c0_46] : memref<1x64xf32, #tpu.memory_space<vmem>>, vector<1x64xf32>
    %126 = vector.broadcast %125 : vector<1x64xf32> to vector<16x64xf32>
    %127 = arith.addf %124, %126 : vector<16x64xf32>
    %cst_47 = arith.constant 0.000000e+00 : f32
    %128 = vector.broadcast %cst_47 : f32 to vector<16x64xf32>
    %129 = arith.maximumf %127, %128 : vector<16x64xf32>
    %c0_48 = arith.constant 0 : index
    %c0_49 = arith.constant 0 : index
    %130 = vector.load %arg11[%c0_48, %c0_49] : memref<64x32xf32, #tpu.memory_space<vmem>>, vector<64x32xf32>
    %cst_50 = arith.constant dense<0.000000e+00> : vector<16x32xf32>
    %131 = tpu.matmul %129, %130, %cst_50 {dimension_numbers = #tpu.dot_dimension_numbers<[1], [0], [0], [1], [0, 0, 1, 1], [], []>} : vector<16x64xf32>, vector<64x32xf32>, vector<16x32xf32> -> vector<16x32xf32>
    %c0_51 = arith.constant 0 : index
    %c0_52 = arith.constant 0 : index
    %132 = vector.load %arg12[%c0_51, %c0_52] : memref<1x32xf32, #tpu.memory_space<vmem>>, vector<1x32xf32>
    %133 = vector.broadcast %132 : vector<1x32xf32> to vector<16x32xf32>
    %134 = arith.addf %131, %133 : vector<16x32xf32>
    %135 = arith.addf %122, %134 : vector<16x32xf32>
    %c0_53 = arith.constant 0 : index
    %c0_54 = arith.constant 0 : index
    %136 = vector.load %arg13[%c0_53, %c0_54] : memref<1x32xf32, #tpu.memory_space<vmem>>, vector<1x32xf32>
    %c0_55 = arith.constant 0 : index
    %c0_56 = arith.constant 0 : index
    %137 = vector.load %arg14[%c0_55, %c0_56] : memref<1x32xf32, #tpu.memory_space<vmem>>, vector<1x32xf32>
    %cst_57 = arith.constant dense<0.000000e+00> : vector<16xf32>
    %138 = vector.multi_reduction <add>, %135, %cst_57 [1] : vector<16x32xf32> to vector<16xf32>
    %139 = vector.shape_cast %138 : vector<16xf32> to vector<16x1xf32>
    %cst_58 = arith.constant 3.200000e+01 : f32
    %140 = vector.broadcast %cst_58 : f32 to vector<16x1xf32>
    %141 = arith.divf %139, %140 : vector<16x1xf32>
    %142 = vector.broadcast %141 : vector<16x1xf32> to vector<16x32xf32>
    %143 = arith.subf %135, %142 : vector<16x32xf32>
    %144 = arith.mulf %143, %143 : vector<16x32xf32>
    %cst_59 = arith.constant dense<0.000000e+00> : vector<16xf32>
    %145 = vector.multi_reduction <add>, %144, %cst_59 [1] : vector<16x32xf32> to vector<16xf32>
    %146 = vector.shape_cast %145 : vector<16xf32> to vector<16x1xf32>
    %cst_60 = arith.constant 3.200000e+01 : f32
    %147 = vector.broadcast %cst_60 : f32 to vector<16x1xf32>
    %148 = arith.divf %146, %147 : vector<16x1xf32>
    %149 = vector.broadcast %141 : vector<16x1xf32> to vector<16x32xf32>
    %150 = arith.subf %135, %149 : vector<16x32xf32>
    %cst_61 = arith.constant 9.99999974E-6 : f32
    %151 = vector.broadcast %cst_61 : f32 to vector<16x1xf32>
    %152 = arith.addf %148, %151 : vector<16x1xf32>
    %153 = math.rsqrt %152 : vector<16x1xf32>
    %154 = vector.broadcast %153 : vector<16x1xf32> to vector<16x32xf32>
    %155 = arith.mulf %150, %154 : vector<16x32xf32>
    %156 = vector.broadcast %136 : vector<1x32xf32> to vector<16x32xf32>
    %157 = arith.mulf %155, %156 : vector<16x32xf32>
    %158 = vector.broadcast %137 : vector<1x32xf32> to vector<16x32xf32>
    %159 = arith.addf %157, %158 : vector<16x32xf32>
    %c0_62 = arith.constant 0 : index
    %c0_63 = arith.constant 0 : index
    %160 = vector.load %arg15[%c0_62, %c0_63] : memref<16x32xf32, #tpu.memory_space<vmem>>, vector<16x32xf32>
    tpu.vector_store %arg15[%c0_62, %c0_63], %159 {strides = array<i32>} : memref<16x32xf32, #tpu.memory_space<vmem>>, vector<16x32xf32>,
    return
  }
  func.func @transform_0(%arg0: i32) -> (i32, i32) {
    %c0_i32 = arith.constant 0 : i32
    %c0_i32_0 = arith.constant 0 : i32
    return %arg0, %c0_i32 : i32, i32
  }
  func.func @transform_1(%arg0: i32) -> (i32, i32, i32) {
    %c0_i32 = arith.constant 0 : i32
    %c0_i32_0 = arith.constant 0 : i32
    %c0_i32_1 = arith.constant 0 : i32
    return %arg0, %c0_i32, %c0_i32_0 : i32, i32, i32
  }
  func.func @transform_2(%arg0: i32) -> (i32, i32) {
    %c0_i32 = arith.constant 0 : i32
    %c0_i32_0 = arith.constant 0 : i32
    %c0_i32_1 = arith.constant 0 : i32
    return %c0_i32, %c0_i32_0 : i32, i32
  }
  func.func @transform_3(%arg0: i32) -> (i32, i32) {
    %c0_i32 = arith.constant 0 : i32
    %c0_i32_0 = arith.constant 0 : i32
    %c0_i32_1 = arith.constant 0 : i32
    return %c0_i32, %c0_i32_0 : i32, i32
  }
  func.func @transform_4(%arg0: i32) -> (i32, i32) {
    %c0_i32 = arith.constant 0 : i32
    %c0_i32_0 = arith.constant 0 : i32
    %c0_i32_1 = arith.constant 0 : i32
    return %c0_i32, %c0_i32_0 : i32, i32
  }
  func.func @transform_5(%arg0: i32) -> (i32, i32) {
    %c0_i32 = arith.constant 0 : i32
    %c0_i32_0 = arith.constant 0 : i32
    %c0_i32_1 = arith.constant 0 : i32
    return %c0_i32, %c0_i32_0 : i32, i32
  }
  func.func @transform_6(%arg0: i32) -> (i32, i32) {
    %c0_i32 = arith.constant 0 : i32
    %c0_i32_0 = arith.constant 0 : i32
    %c0_i32_1 = arith.constant 0 : i32
    return %c0_i32, %c0_i32_0 : i32, i32
  }
  func.func @transform_7(%arg0: i32) -> (i32, i32) {
    %c0_i32 = arith.constant 0 : i32
    %c0_i32_0 = arith.constant 0 : i32
    %c0_i32_1 = arith.constant 0 : i32
    return %c0_i32, %c0_i32_0 : i32, i32
  }
  func.func @transform_8(%arg0: i32) -> (i32, i32) {
    %c0_i32 = arith.constant 0 : i32
    %c0_i32_0 = arith.constant 0 : i32
    %c0_i32_1 = arith.constant 0 : i32
    return %c0_i32, %c0_i32_0 : i32, i32
  }
  func.func @transform_9(%arg0: i32) -> (i32, i32) {
    %c0_i32 = arith.constant 0 : i32
    %c0_i32_0 = arith.constant 0 : i32
    %c0_i32_1 = arith.constant 0 : i32
    return %c0_i32, %c0_i32_0 : i32, i32
  }
  func.func @transform_10(%arg0: i32) -> (i32, i32) {
    %c0_i32 = arith.constant 0 : i32
    %c0_i32_0 = arith.constant 0 : i32
    %c0_i32_1 = arith.constant 0 : i32
    return %c0_i32, %c0_i32_0 : i32, i32
  }
  func.func @transform_11(%arg0: i32) -> (i32, i32) {
    %c0_i32 = arith.constant 0 : i32
    %c0_i32_0 = arith.constant 0 : i32
    %c0_i32_1 = arith.constant 0 : i32
    return %c0_i32, %c0_i32_0 : i32, i32
  }
  func.func @transform_12(%arg0: i32) -> (i32, i32) {
    %c0_i32 = arith.constant 0 : i32
    %c0_i32_0 = arith.constant 0 : i32
    %c0_i32_1 = arith.constant 0 : i32
    return %c0_i32, %c0_i32_0 : i32, i32
  }
  func.func @transform_13(%arg0: i32) -> (i32, i32) {
    %c0_i32 = arith.constant 0 : i32
    %c0_i32_0 = arith.constant 0 : i32
    %c0_i32_1 = arith.constant 0 : i32
    return %c0_i32, %c0_i32_0 : i32, i32
  }
  func.func @transform_14(%arg0: i32) -> (i32, i32) {
    %c0_i32 = arith.constant 0 : i32
    %c0_i32_0 = arith.constant 0 : i32
    return %arg0, %c0_i32 : i32, i32
  }
}

</mosaic_0001>

<llo_original>
// kernel: tpu_custom_call.1
$region0: #{tpu_custom_call.1}
  #allocation0 [shape = 'u32[]', space=smem, size = 0x4, offset = 0x4, fixed_abs, tag = 'smem constant byte address 0x4 - core index']
  #allocation1 [shape = 'u32[144,128]{1,0:T(1,128)}', space=vmem, size = 0x12000, scoped, tag = 'internal scratch']
  %s0 = inlined_call_operand.hbm [shape: f32[16,32], index: 0, kind: input, shape index: {}]
  %s1 = inlined_call_operand.hbm [shape: f32[2,8,8], index: 1, kind: input, shape index: {}]
  %s2 = inlined_call_operand.vmem [shape: f32[32,96], index: 2, kind: input, shape index: {}]
  %s3 = inlined_call_operand.vmem [shape: f32[1,96], index: 3, kind: input, shape index: {}]
  %s4 = inlined_call_operand.vmem [shape: f32[32,32], index: 4, kind: input, shape index: {}]
  %s5 = inlined_call_operand.vmem [shape: f32[1,32], index: 5, kind: input, shape index: {}]
  %s6 = inlined_call_operand.vmem [shape: f32[1,32], index: 6, kind: input, shape index: {}]
  %s7 = inlined_call_operand.vmem [shape: f32[1,32], index: 7, kind: input, shape index: {}]
  %s8 = inlined_call_operand.vmem [shape: f32[32,64], index: 8, kind: input, shape index: {}]
  %s9 = inlined_call_operand.vmem [shape: f32[1,64], index: 9, kind: input, shape index: {}]
  %s10 = inlined_call_operand.vmem [shape: f32[64,32], index: 10, kind: input, shape index: {}]
  %s11 = inlined_call_operand.vmem [shape: f32[1,32], index: 11, kind: input, shape index: {}]
  %s12 = inlined_call_operand.vmem [shape: f32[1,32], index: 12, kind: input, shape index: {}]
  %s13 = inlined_call_operand.vmem [shape: f32[1,32], index: 13, kind: input, shape index: {}]
  %s14 = inlined_call_operand.hbm [shape: f32[16,32], index: 14, kind: output, shape index: {}]
  %s15 = sld [smem:[#allocation0]]
  $region74: #{tpu_custom_call.1} parent=0
    _
  %s17 = ssub.s32 1, %s15
  %s18 = scalar_select 0, %s17, %s15
  $region1: #{tpu_custom_call.1} parent=0
    #allocation2 [shape = 'u8[8192]{0}', space=vmem, size = 0x2000, scoped, tag = 'input window, operand 0, single buffered']
    #allocation3 [shape = 's32[1]{0}', space=sflag, size = 0x4, scoped, tag = 'scoped memory for tpu_custom_call.1']
    #allocation4 [shape = 's32[1]{0}', space=sflag, size = 0x4, scoped, tag = 'scoped memory for tpu_custom_call.1']
    #allocation5 [shape = 'u8[8192]{0}', space=vmem, size = 0x2000, scoped, tag = 'input window, operand 1, single buffered']
    #allocation6 [shape = 's32[1]{0}', space=sflag, size = 0x4, scoped, tag = 'scoped memory for tpu_custom_call.1']
    #allocation7 [shape = 'u8[8192]{0}', space=vmem, size = 0x2000, scoped, tag = 'output window, operand 0, single buffered']
    %19 = vsyncpa [#allocation3], 0
    %20 = vsyncpa [#allocation6], 0
    %21 = vsyncpa [#allocation4], 0
    // Predicated region
    $region2: #{tpu_custom_call.1} parent=1 // pred_check
      _
    $region3: #{tpu_custom_call.1} parent=1 // pred_check_branch
      %23 = sbr.rel (0) target = $region5
    $region4: #{tpu_custom_call.1} parent=1 // pred_region
      %s25 = ssub.s32 256, 256
      %26 = vsyncadd [#allocation3], %s25
      %s27 = sshll.u32 [#allocation2], 4
      %s28 = int_to_ptr.vmem [resolvable:$true] %s27
      %33 = dma.hbm_to_vmem [thread:$0]  %s0, 256, %s28, [#allocation3], 128, 128, 8
    $region5: #{tpu_custom_call.1} parent=1 // pred_fallthru
      _
    // Predicated region
    $region6: #{tpu_custom_call.1} parent=1 // pred_check
      _
    $region7: #{tpu_custom_call.1} parent=1 // pred_check_branch
      %35 = sbr.rel (0) target = $region9
    $region8: #{tpu_custom_call.1} parent=1 // pred_region
      %s37 = ssub.s32 256, 256
      %38 = vsyncadd [#allocation6], %s37
      %s39 = sshll.u32 [#allocation5], 4
      %s40 = int_to_ptr.vmem [resolvable:$true] %s39
      %45 = dma.hbm_to_vmem [thread:$0]  %s1, 256, %s40, [#allocation6], 128, 128, 8
    $region9: #{tpu_custom_call.1} parent=1 // pred_fallthru
      _
    // Predicated region
    $region10: #{tpu_custom_call.1} parent=1 // pred_check
      _
    $region11: #{tpu_custom_call.1} parent=1 // pred_check_branch
      %47 = sbr.rel (0) target = $region13
    $region12: #{tpu_custom_call.1} parent=1 // pred_region
      _
    $region13: #{tpu_custom_call.1} parent=1 // pred_fallthru
      _
    // Predicated region
    $region14: #{tpu_custom_call.1} parent=1 // pred_check
      _
    $region15: #{tpu_custom_call.1} parent=1 // pred_check_branch
      %49 = sbr.rel (0) target = $region17
    $region16: #{tpu_custom_call.1} parent=1 // pred_region
      _
    $region17: #{tpu_custom_call.1} parent=1 // pred_fallthru
      _
    // Predicated region
    $region18: #{tpu_custom_call.1} parent=1 // pred_check
      _
    $region19: #{tpu_custom_call.1} parent=1 // pred_check_branch
      %51 = sbr.rel (0) target = $region21
    $region20: #{tpu_custom_call.1} parent=1 // pred_region
      _
    $region21: #{tpu_custom_call.1} parent=1 // pred_fallthru
      _
    // Predicated region
    $region22: #{tpu_custom_call.1} parent=1 // pred_check
      _
    $region23: #{tpu_custom_call.1} parent=1 // pred_check_branch
      %53 = sbr.rel (0) target = $region25
    $region24: #{tpu_custom_call.1} parent=1 // pred_region
      _
    $region25: #{tpu_custom_call.1} parent=1 // pred_fallthru
      _
    // Predicated region
    $region26: #{tpu_custom_call.1} parent=1 // pred_check
      _
    $region27: #{tpu_custom_call.1} parent=1 // pred_check_branch
      %55 = sbr.rel (0) target = $region29
    $region28: #{tpu_custom_call.1} parent=1 // pred_region
      _
    $region29: #{tpu_custom_call.1} parent=1 // pred_fallthru
      _
    // Predicated region
    $region30: #{tpu_custom_call.1} parent=1 // pred_check
      _
    $region31: #{tpu_custom_call.1} parent=1 // pred_check_branch
      %57 = sbr.rel (0) target = $region33
    $region32: #{tpu_custom_call.1} parent=1 // pred_region
      _
    $region33: #{tpu_custom_call.1} parent=1 // pred_fallthru
      _
    // Predicated region
    $region34: #{tpu_custom_call.1} parent=1 // pred_check
      _
    $region35: #{tpu_custom_call.1} parent=1 // pred_check_branch
      %59 = sbr.rel (0) target = $region37
    $region36: #{tpu_custom_call.1} parent=1 // pred_region
      _
    $region37: #{tpu_custom_call.1} parent=1 // pred_fallthru
      _
    // Predicated region
    $region38: #{tpu_custom_call.1} parent=1 // pred_check
      _
    $region39: #{tpu_custom_call.1} parent=1 // pred_check_branch
      %61 = sbr.rel (0) target = $region41
    $region40: #{tpu_custom_call.1} parent=1 // pred_region
      _
    $region41: #{tpu_custom_call.1} parent=1 // pred_fallthru
      _
    // Predicated region
    $region42: #{tpu_custom_call.1} parent=1 // pred_check
      _
    $region43: #{tpu_custom_call.1} parent=1 // pred_check_branch
      %63 = sbr.rel (0) target = $region45
    $region44: #{tpu_custom_call.1} parent=1 // pred_region
      _
    $region45: #{tpu_custom_call.1} parent=1 // pred_fallthru
      _
    // Predicated region
    $region46: #{tpu_custom_call.1} parent=1 // pred_check
      _
    $region47: #{tpu_custom_call.1} parent=1 // pred_check_branch
      %65 = sbr.rel (0) target = $region49
    $region48: #{tpu_custom_call.1} parent=1 // pred_region
      _
    $region49: #{tpu_custom_call.1} parent=1 // pred_fallthru
      _
    // Predicated region
    $region50: #{tpu_custom_call.1} parent=1 // pred_check
      _
    $region51: #{tpu_custom_call.1} parent=1 // pred_check_branch
      %67 = sbr.rel (0) target = $region53
    $region52: #{tpu_custom_call.1} parent=1 // pred_region
      _
    $region53: #{tpu_custom_call.1} parent=1 // pred_fallthru
      _
    // Predicated region
    $region54: #{tpu_custom_call.1} parent=1 // pred_check
      _
    $region55: #{tpu_custom_call.1} parent=1 // pred_check_branch
      %69 = sbr.rel (0) target = $region57
    $region56: #{tpu_custom_call.1} parent=1 // pred_region
      _
    $region57: #{tpu_custom_call.1} parent=1 // pred_fallthru
      _
    // Predicated region
    $region58: #{tpu_custom_call.1} parent=1 // pred_check
      _
    $region59: #{tpu_custom_call.1} parent=1 // pred_check_branch
      %71 = sbr.rel (0) target = $region61
    $region60: #{tpu_custom_call.1} parent=1 // pred_region
      %72 = dma.done [#allocation3], 256
    $region61: #{tpu_custom_call.1} parent=1 // pred_fallthru
      _
    // Predicated region
    $region62: #{tpu_custom_call.1} parent=1 // pred_check
      _
    $region63: #{tpu_custom_call.1} parent=1 // pred_check_branch
      %74 = sbr.rel (0) target = $region65
    $region64: #{tpu_custom_call.1} parent=1 // pred_region
      %75 = dma.done [#allocation6], 256
    $region65: #{tpu_custom_call.1} parent=1 // pred_fallthru
      _
    %v76 = vld [vmem:[#allocation2] sm:$0xff]
    %v77 = vld [vmem:[#allocation2 + $0x8] sm:$0xff]
    %v78 = vld [vmem:[%s2] sm:$0xff]
    %v79 = vld [vmem:[%s2 + $0x8] sm:$0xff]
    %v80 = vld [vmem:[%s2 + $0x10] sm:$0xff]
    %v81 = vld [vmem:[%s2 + $0x18] sm:$0xff]
    %v82 = vld [vmem:[%s3] sm:$0x1]
    %v84 = vlaneseq
    %v85 = vshrl.u32 %v84, 7
    %v86 = vsub.s32 0, %v85
    %v87 = vrot.slane %v82, %v86
    %vm89 = vcmask 261120
    %v91 = vsel %vm89, %v76, 0
    %v94 = vsel %vm89, %v77, 0
    %96 = vmatprep.subr.mxu0 0.0
    %97 = vmatpush1.msra.mxu0 %v78
    %98 = vmatprep.subr.mxu0 0.0
    %99 = vmatpush1.msra.mxu0 %v79
    %100 = vmatprep.subr.mxu0 0.0
    %101 = vmatpush1.msra.mxu0 %v80
    %102 = vmatprep.subr.mxu0 0.0
    %103 = vmatpush1.msra.mxu0 %v81
    %104 = vmatprep.subr.mxu0 0.0
    %105 = vmatpush1.msra.mxu0 0.0
    %106 = vmatprep.subr.mxu0 0.0
    %107 = vmatpush1.msra.mxu0 0.0
    %108 = vmatprep.subr.mxu0 0.0
    %109 = vmatpush1.msra.mxu0 0.0
    %110 = vmatprep.subr.mxu0 0.0
    %111 = vmatpush1.msra.mxu0 0.0
    %112 = vmatprep.subr.mxu0 0.0
    %113 = vmatpush1.msra.mxu0 0.0
    %114 = vmatprep.subr.mxu0 0.0
    %115 = vmatpush1.msra.mxu0 0.0
    %116 = vmatprep.subr.mxu0 0.0
    %117 = vmatpush1.msra.mxu0 0.0
    %118 = vmatprep.subr.mxu0 0.0
    %119 = vmatpush1.msra.mxu0 0.0
    %120 = vmatprep.subr.mxu0 0.0
    %121 = vmatpush1.msra.mxu0 0.0
    %122 = vmatprep.subr.mxu0 0.0
    %123 = vmatpush1.msra.mxu0 0.0
    %124 = vmatprep.subr.mxu0 0.0
    %125 = vmatpush1.msra.mxu0 0.0
    %126 = vmatprep.subr.mxu0 0.0
    %127 = vmatpush1.msra.mxu0 0.0
    %128 = vmatprep.subr.mxu0 0.0
    %129 = vmatpush1.msra.mxu0 0.0
    %130 = vmatprep.subr.mxu0 0.0
    %131 = vmatpush1.msra.mxu0 0.0
    %132 = vmatprep.subr.mxu0 0.0
    %133 = vmatpush1.msra.mxu0 0.0
    %134 = vmatprep.subr.mxu0 0.0
    %135 = vmatpush1.msra.mxu0 0.0
    %136 = vmatprep.subr.mxu0 0.0
    %137 = vmatpush1.msra.mxu0 0.0
    %138 = vmatprep.subr.mxu0 0.0
    %139 = vmatpush1.msra.mxu0 0.0
    %140 = vmatprep.subr.mxu0 0.0
    %141 = vmatpush1.msra.mxu0 0.0
    %142 = vmatprep.subr.mxu0 0.0
    %143 = vmatpush1.msra.mxu0 0.0
    %144 = vmatprep.subr.mxu0 0.0
    %145 = vmatpush1.msra.mxu0 0.0
    %146 = vmatprep.subr.mxu0 0.0
    %147 = vmatpush1.msra.mxu0 0.0
    %148 = vmatprep.subr.mxu0 0.0
    %149 = vmatpush1.msra.mxu0 0.0
    %150 = vmatprep.subr.mxu0 0.0
    %151 = vmatpush1.msra.mxu0 0.0
    %152 = vmatprep.subr.mxu0 0.0
    %153 = vmatpush1.msra.mxu0 0.0
    %154 = vmatprep.subr.mxu0 0.0
    %155 = vmatpush1.msra.mxu0 0.0
    %156 = vmatprep.subr.mxu0 0.0
    %157 = vmatpush1.msra.mxu0 0.0
    %158 = vmatprep.subr.mxu0 0.0
    %159 = vmatpush1.msra.mxu0 0.0
    %160 = vmatprep.mubr.f32.mxu0 0.0
    %161 = vmatmul.mubr.f32.gmra.mrb[0].mxu0 %v91
    %v162 = vpop.f32.mrb[0].mxu0
    %v163 = vadd.f32 %v87, %v162
    %v164 = vpop.f32.mrb[0].mxu0
    %165 = vmatprep.mubr.f32.mxu0 0.0
    %166 = vmatmul.mubr.f32.gmra.mrb[0].mxu0 %v94
    %v167 = vpop.f32.mrb[0].mxu0
    %v168 = vadd.f32 %v87, %v167
    %v169 = vpop.f32.mrb[0].mxu0
    %170 = vdwg.mxu0
    %v171 = vld [vmem:[#allocation5] sm:$0xff]
    %v172 = vld [vmem:[#allocation5 + $0x8] sm:$0xff]
    %v173 = vld [vmem:[%s4] sm:$0xff]
    %v174 = vld [vmem:[%s4 + $0x8] sm:$0xff]
    %v175 = vld [vmem:[%s4 + $0x10] sm:$0xff]
    %v176 = vld [vmem:[%s4 + $0x18] sm:$0xff]
    %178 = vrot.lane.b32.xlu0 %v163, 96
    %v179 = vpop.permute.xlu0 %178
    %vm180 = vcmask 64512
    %v181 = vsel %vm180, %v163, 0
    %v183 = vsel %vm180, %v179, 0
    %185 = vmatprep.subr.mxu0 0.0
    %186 = vmatpush1.xpose.msra.mxu0 %v183
    %187 = vmatprep.subr.mxu0 0.0
    %188 = vmatpush1.xpose.msra.mxu0 0.0
    %189 = vmatprep.subr.mxu0 0.0
    %190 = vmatpush1.xpose.msra.mxu0 0.0
    %191 = vmatprep.subr.mxu0 0.0
    %192 = vmatpush1.xpose.msra.mxu0 0.0
    %193 = vmatprep.subr.mxu0 0.0
    %194 = vmatpush1.xpose.msra.mxu0 0.0
    %195 = vmatprep.subr.mxu0 0.0
    %196 = vmatpush1.xpose.msra.mxu0 0.0
    %197 = vmatprep.subr.mxu0 0.0
    %198 = vmatpush1.xpose.msra.mxu0 0.0
    %199 = vmatprep.subr.mxu0 0.0
    %200 = vmatpush1.xpose.msra.mxu0 0.0
    %201 = vmatprep.subr.mxu0 0.0
    %202 = vmatpush1.xpose.msra.mxu0 0.0
    %203 = vmatprep.subr.mxu0 0.0
    %204 = vmatpush1.xpose.msra.mxu0 0.0
    %205 = vmatprep.subr.mxu0 0.0
    %206 = vmatpush1.xpose.msra.mxu0 0.0
    %207 = vmatprep.subr.mxu0 0.0
    %208 = vmatpush1.xpose.msra.mxu0 0.0
    %209 = vmatprep.subr.mxu0 0.0
    %210 = vmatpush1.xpose.msra.mxu0 0.0
    %211 = vmatprep.subr.mxu0 0.0
    %212 = vmatpush1.xpose.msra.mxu0 0.0
    %213 = vmatprep.subr.mxu0 0.0
    %214 = vmatpush1.xpose.msra.mxu0 0.0
    %215 = vmatprep.subr.mxu0 0.0
    %216 = vmatpush1.xpose.msra.mxu0 0.0
    %217 = vmatprep.subr.mxu0 0.0
    %218 = vmatpush1.xpose.msra.mxu0 0.0
    %219 = vmatprep.subr.mxu0 0.0
    %220 = vmatpush1.xpose.msra.mxu0 0.0
    %221 = vmatprep.subr.mxu0 0.0
    %222 = vmatpush1.xpose.msra.mxu0 0.0
    %223 = vmatprep.subr.mxu0 0.0
    %224 = vmatpush1.xpose.msra.mxu0 0.0
    %225 = vmatprep.subr.mxu0 0.0
    %226 = vmatpush1.xpose.msra.mxu0 0.0
    %227 = vmatprep.subr.mxu0 0.0
    %228 = vmatpush1.xpose.msra.mxu0 0.0
    %229 = vmatprep.subr.mxu0 0.0
    %230 = vmatpush1.xpose.msra.mxu0 0.0
    %231 = vmatprep.subr.mxu0 0.0
    %232 = vmatpush1.xpose.msra.mxu0 0.0
    %233 = vmatprep.subr.mxu0 0.0
    %234 = vmatpush1.xpose.msra.mxu0 0.0
    %235 = vmatprep.subr.mxu0 0.0
    %236 = vmatpush1.xpose.msra.mxu0 0.0
    %237 = vmatprep.subr.mxu0 0.0
    %238 = vmatpush1.xpose.msra.mxu0 0.0
    %239 = vmatprep.subr.mxu0 0.0
    %240 = vmatpush1.xpose.msra.mxu0 0.0
    %241 = vmatprep.subr.mxu0 0.0
    %242 = vmatpush1.xpose.msra.mxu0 0.0
    %243 = vmatprep.subr.mxu0 0.0
    %244 = vmatpush1.xpose.msra.mxu0 0.0
    %245 = vmatprep.subr.mxu0 0.0
    %246 = vmatpush1.xpose.msra.mxu0 0.0
    %247 = vmatprep.subr.mxu0 0.0
    %248 = vmatpush1.xpose.msra.mxu0 0.0
    %249 = vmatprep.mubr.f32.mxu0 0.0
    %250 = vmatmul.mubr.f32.gmra.mrb[0].mxu0 %v181
    %v251 = vpop.f32.mrb[0].mxu0
    %v252 = vadd.f32 %v171, %v251
    %v253 = vpop.f32.mrb[0].mxu0
    %254 = vdwg.mxu0
    %256 = vrot.lane.b32.xlu0 %v168, 96
    %v257 = vpop.permute.xlu0 %256
    %v258 = vsel %vm180, %v168, 0
    %v260 = vsel %vm180, %v257, 0
    %262 = vmatprep.subr.mxu0 0.0
    %263 = vmatpush1.xpose.msra.mxu0 %v260
    %264 = vmatprep.subr.mxu0 0.0
    %265 = vmatpush1.xpose.msra.mxu0 0.0
    %266 = vmatprep.subr.mxu0 0.0
    %267 = vmatpush1.xpose.msra.mxu0 0.0
    %268 = vmatprep.subr.mxu0 0.0
    %269 = vmatpush1.xpose.msra.mxu0 0.0
    %270 = vmatprep.subr.mxu0 0.0
    %271 = vmatpush1.xpose.msra.mxu0 0.0
    %272 = vmatprep.subr.mxu0 0.0
    %273 = vmatpush1.xpose.msra.mxu0 0.0
    %274 = vmatprep.subr.mxu0 0.0
    %275 = vmatpush1.xpose.msra.mxu0 0.0
    %276 = vmatprep.subr.mxu0 0.0
    %277 = vmatpush1.xpose.msra.mxu0 0.0
    %278 = vmatprep.subr.mxu0 0.0
    %279 = vmatpush1.xpose.msra.mxu0 0.0
    %280 = vmatprep.subr.mxu0 0.0
    %281 = vmatpush1.xpose.msra.mxu0 0.0
    %282 = vmatprep.subr.mxu0 0.0
    %283 = vmatpush1.xpose.msra.mxu0 0.0
    %284 = vmatprep.subr.mxu0 0.0
    %285 = vmatpush1.xpose.msra.mxu0 0.0
    %286 = vmatprep.subr.mxu0 0.0
    %287 = vmatpush1.xpose.msra.mxu0 0.0
    %288 = vmatprep.subr.mxu0 0.0
    %289 = vmatpush1.xpose.msra.mxu0 0.0
    %290 = vmatprep.subr.mxu0 0.0
    %291 = vmatpush1.xpose.msra.mxu0 0.0
    %292 = vmatprep.subr.mxu0 0.0
    %293 = vmatpush1.xpose.msra.mxu0 0.0
    %294 = vmatprep.subr.mxu0 0.0
    %295 = vmatpush1.xpose.msra.mxu0 0.0
    %296 = vmatprep.subr.mxu0 0.0
    %297 = vmatpush1.xpose.msra.mxu0 0.0
    %298 = vmatprep.subr.mxu0 0.0
    %299 = vmatpush1.xpose.msra.mxu0 0.0
    %300 = vmatprep.subr.mxu0 0.0
    %301 = vmatpush1.xpose.msra.mxu0 0.0
    %302 = vmatprep.subr.mxu0 0.0
    %303 = vmatpush1.xpose.msra.mxu0 0.0
    %304 = vmatprep.subr.mxu0 0.0
    %305 = vmatpush1.xpose.msra.mxu0 0.0
    %306 = vmatprep.subr.mxu0 0.0
    %307 = vmatpush1.xpose.msra.mxu0 0.0
    %308 = vmatprep.subr.mxu0 0.0
    %309 = vmatpush1.xpose.msra.mxu0 0.0
    %310 = vmatprep.subr.mxu0 0.0
    %311 = vmatpush1.xpose.msra.mxu0 0.0
    %312 = vmatprep.subr.mxu0 0.0
    %313 = vmatpush1.xpose.msra.mxu0 0.0
    %314 = vmatprep.subr.mxu0 0.0
    %315 = vmatpush1.xpose.msra.mxu0 0.0
    %316 = vmatprep.subr.mxu0 0.0
    %317 = vmatpush1.xpose.msra.mxu0 0.0
    %318 = vmatprep.subr.mxu0 0.0
    %319 = vmatpush1.xpose.msra.mxu0 0.0
    %320 = vmatprep.subr.mxu0 0.0
    %321 = vmatpush1.xpose.msra.mxu0 0.0
    %322 = vmatprep.subr.mxu0 0.0
    %323 = vmatpush1.xpose.msra.mxu0 0.0
    %324 = vmatprep.subr.mxu0 0.0
    %325 = vmatpush1.xpose.msra.mxu0 0.0
    %326 = vmatprep.mubr.f32.mxu0 0.0
    %327 = vmatmul.mubr.f32.gmra.mrb[0].mxu0 %v258
    %v328 = vpop.f32.mrb[0].mxu0
    %v329 = vadd.f32 %v172, %v328
    %v330 = vpop.f32.mrb[0].mxu0
    %331 = vdwg.mxu0
    %v332 = vsel %vm180, %v252, -inf
    %333 = vmax.xlane.f32.xlu0 %v332
    %v334 = vpop.xlane.xlu0 %333
    %v335 = vsel %vm180, %v329, -inf
    %336 = vmax.xlane.f32.xlu0 %v335
    %v337 = vpop.xlane.xlu0 %336
    %v338 = vsub.f32 %v252, %v334
    %v339 = vsub.f32 %v329, %v337
    %v340 = vmul.f32 %v338, 1.442695
    %v341 = vpow.pop %v340
    %v342 = vmul.f32 %v339, 1.442695
    %v343 = vpow.pop %v342
    %v344 = vsel %vm180, %v341, 0.0
    %345 = vadd.xlane.f32.xlu0 %v344
    %v346 = vpop.xlane.xlu0 %345
    %v347 = vsel %vm180, %v343, 0.0
    %348 = vadd.xlane.f32.xlu0 %v347
    %v349 = vpop.xlane.xlu0 %348
    %v350 = vrcp.pop %v346
    %v351 = vrcp.pop %v349
    %v352 = vmul.f32 %v341, %v350
    %v353 = vmul.f32 %v343, %v351
    %354 = vrot.lane.b32.xlu0 %v163, 64
    %v355 = vpop.permute.xlu0 %354
    %v358 = vsel %vm180, %v352, 0
    %360 = vmatprep.subr.mxu0 0.0
    %361 = vmatpush1.msra.mxu0 %v355
    %362 = vmatprep.subr.mxu0 0.0
    %363 = vmatpush1.msra.mxu0 0.0
    %364 = vmatprep.subr.mxu0 0.0
    %365 = vmatpush1.msra.mxu0 0.0
    %366 = vmatprep.subr.mxu0 0.0
    %367 = vmatpush1.msra.mxu0 0.0
    %368 = vmatprep.subr.mxu0 0.0
    %369 = vmatpush1.msra.mxu0 0.0
    %370 = vmatprep.subr.mxu0 0.0
    %371 = vmatpush1.msra.mxu0 0.0
    %372 = vmatprep.subr.mxu0 0.0
    %373 = vmatpush1.msra.mxu0 0.0
    %374 = vmatprep.subr.mxu0 0.0
    %375 = vmatpush1.msra.mxu0 0.0
    %376 = vmatprep.subr.mxu0 0.0
    %377 = vmatpush1.msra.mxu0 0.0
    %378 = vmatprep.subr.mxu0 0.0
    %379 = vmatpush1.msra.mxu0 0.0
    %380 = vmatprep.subr.mxu0 0.0
    %381 = vmatpush1.msra.mxu0 0.0
    %382 = vmatprep.subr.mxu0 0.0
    %383 = vmatpush1.msra.mxu0 0.0
    %384 = vmatprep.subr.mxu0 0.0
    %385 = vmatpush1.msra.mxu0 0.0
    %386 = vmatprep.subr.mxu0 0.0
    %387 = vmatpush1.msra.mxu0 0.0
    %388 = vmatprep.subr.mxu0 0.0
    %389 = vmatpush1.msra.mxu0 0.0
    %390 = vmatprep.subr.mxu0 0.0
    %391 = vmatpush1.msra.mxu0 0.0
    %392 = vmatprep.subr.mxu0 0.0
    %393 = vmatpush1.msra.mxu0 0.0
    %394 = vmatprep.subr.mxu0 0.0
    %395 = vmatpush1.msra.mxu0 0.0
    %396 = vmatprep.subr.mxu0 0.0
    %397 = vmatpush1.msra.mxu0 0.0
    %398 = vmatprep.subr.mxu0 0.0
    %399 = vmatpush1.msra.mxu0 0.0
    %400 = vmatprep.subr.mxu0 0.0
    %401 = vmatpush1.msra.mxu0 0.0
    %402 = vmatprep.subr.mxu0 0.0
    %403 = vmatpush1.msra.mxu0 0.0
    %404 = vmatprep.subr.mxu0 0.0
    %405 = vmatpush1.msra.mxu0 0.0
    %406 = vmatprep.subr.mxu0 0.0
    %407 = vmatpush1.msra.mxu0 0.0
    %408 = vmatprep.subr.mxu0 0.0
    %409 = vmatpush1.msra.mxu0 0.0
    %410 = vmatprep.subr.mxu0 0.0
    %411 = vmatpush1.msra.mxu0 0.0
    %412 = vmatprep.subr.mxu0 0.0
    %413 = vmatpush1.msra.mxu0 0.0
    %414 = vmatprep.subr.mxu0 0.0
    %415 = vmatpush1.msra.mxu0 0.0
    %416 = vmatprep.subr.mxu0 0.0
    %417 = vmatpush1.msra.mxu0 0.0
    %418 = vmatprep.subr.mxu0 0.0
    %419 = vmatpush1.msra.mxu0 0.0
    %420 = vmatprep.subr.mxu0 0.0
    %421 = vmatpush1.msra.mxu0 0.0
    %422 = vmatprep.subr.mxu0 0.0
    %423 = vmatpush1.msra.mxu0 0.0
    %424 = vmatprep.mubr.f32.mxu0 0.0
    %425 = vmatmul.mubr.f32.gmra.mrb[0].mxu0 %v358
    %v426 = vpop.f32.mrb[0].mxu0
    %v427 = vadd.f32 0.0, %v426
    %v428 = vpop.f32.mrb[0].mxu0
    %429 = vdwg.mxu0
    %430 = vrot.lane.b32.xlu0 %v168, 64
    %v431 = vpop.permute.xlu0 %430
    %v434 = vsel %vm180, %v353, 0
    %436 = vmatprep.subr.mxu0 0.0
    %437 = vmatpush1.msra.mxu0 %v431
    %438 = vmatprep.subr.mxu0 0.0
    %439 = vmatpush1.msra.mxu0 0.0
    %440 = vmatprep.subr.mxu0 0.0
    %441 = vmatpush1.msra.mxu0 0.0
    %442 = vmatprep.subr.mxu0 0.0
    %443 = vmatpush1.msra.mxu0 0.0
    %444 = vmatprep.subr.mxu0 0.0
    %445 = vmatpush1.msra.mxu0 0.0
    %446 = vmatprep.subr.mxu0 0.0
    %447 = vmatpush1.msra.mxu0 0.0
    %448 = vmatprep.subr.mxu0 0.0
    %449 = vmatpush1.msra.mxu0 0.0
    %450 = vmatprep.subr.mxu0 0.0
    %451 = vmatpush1.msra.mxu0 0.0
    %452 = vmatprep.subr.mxu0 0.0
    %453 = vmatpush1.msra.mxu0 0.0
    %454 = vmatprep.subr.mxu0 0.0
    %455 = vmatpush1.msra.mxu0 0.0
    %456 = vmatprep.subr.mxu0 0.0
    %457 = vmatpush1.msra.mxu0 0.0
    %458 = vmatprep.subr.mxu0 0.0
    %459 = vmatpush1.msra.mxu0 0.0
    %460 = vmatprep.subr.mxu0 0.0
    %461 = vmatpush1.msra.mxu0 0.0
    %462 = vmatprep.subr.mxu0 0.0
    %463 = vmatpush1.msra.mxu0 0.0
    %464 = vmatprep.subr.mxu0 0.0
    %465 = vmatpush1.msra.mxu0 0.0
    %466 = vmatprep.subr.mxu0 0.0
    %467 = vmatpush1.msra.mxu0 0.0
    %468 = vmatprep.subr.mxu0 0.0
    %469 = vmatpush1.msra.mxu0 0.0
    %470 = vmatprep.subr.mxu0 0.0
    %471 = vmatpush1.msra.mxu0 0.0
    %472 = vmatprep.subr.mxu0 0.0
    %473 = vmatpush1.msra.mxu0 0.0
    %474 = vmatprep.subr.mxu0 0.0
    %475 = vmatpush1.msra.mxu0 0.0
    %476 = vmatprep.subr.mxu0 0.0
    %477 = vmatpush1.msra.mxu0 0.0
    %478 = vmatprep.subr.mxu0 0.0
    %479 = vmatpush1.msra.mxu0 0.0
    %480 = vmatprep.subr.mxu0 0.0
    %481 = vmatpush1.msra.mxu0 0.0
    %482 = vmatprep.subr.mxu0 0.0
    %483 = vmatpush1.msra.mxu0 0.0
    %484 = vmatprep.subr.mxu0 0.0
    %485 = vmatpush1.msra.mxu0 0.0
    %486 = vmatprep.subr.mxu0 0.0
    %487 = vmatpush1.msra.mxu0 0.0
    %488 = vmatprep.subr.mxu0 0.0
    %489 = vmatpush1.msra.mxu0 0.0
    %490 = vmatprep.subr.mxu0 0.0
    %491 = vmatpush1.msra.mxu0 0.0
    %492 = vmatprep.subr.mxu0 0.0
    %493 = vmatpush1.msra.mxu0 0.0
    %494 = vmatprep.subr.mxu0 0.0
    %495 = vmatpush1.msra.mxu0 0.0
    %496 = vmatprep.subr.mxu0 0.0
    %497 = vmatpush1.msra.mxu0 0.0
    %498 = vmatprep.subr.mxu0 0.0
    %499 = vmatpush1.msra.mxu0 0.0
    %500 = vmatprep.mubr.f32.mxu0 0.0
    %501 = vmatmul.mubr.f32.gmra.mrb[0].mxu0 %v434
    %v502 = vpop.f32.mrb[0].mxu0
    %v503 = vadd.f32 0.0, %v502
    %v504 = vpop.f32.mrb[0].mxu0
    %505 = vdwg.mxu0
    %506 = vrot.lane.b32.xlu0 %v163, 120
    %v507 = vpop.permute.xlu0 %506
    %508 = vrot.lane.b32.xlu0 %v163, 88
    %v509 = vpop.permute.xlu0 %508
    %v510 = vsel %vm180, %v507, 0
    %v512 = vsel %vm180, %v509, 0
    %514 = vmatprep.subr.mxu0 0.0
    %515 = vmatpush1.xpose.msra.mxu0 %v512
    %516 = vmatprep.subr.mxu0 0.0
    %517 = vmatpush1.xpose.msra.mxu0 0.0
    %518 = vmatprep.subr.mxu0 0.0
    %519 = vmatpush1.xpose.msra.mxu0 0.0
    %520 = vmatprep.subr.mxu0 0.0
    %521 = vmatpush1.xpose.msra.mxu0 0.0
    %522 = vmatprep.subr.mxu0 0.0
    %523 = vmatpush1.xpose.msra.mxu0 0.0
    %524 = vmatprep.subr.mxu0 0.0
    %525 = vmatpush1.xpose.msra.mxu0 0.0
    %526 = vmatprep.subr.mxu0 0.0
    %527 = vmatpush1.xpose.msra.mxu0 0.0
    %528 = vmatprep.subr.mxu0 0.0
    %529 = vmatpush1.xpose.msra.mxu0 0.0
    %530 = vmatprep.subr.mxu0 0.0
    %531 = vmatpush1.xpose.msra.mxu0 0.0
    %532 = vmatprep.subr.mxu0 0.0
    %533 = vmatpush1.xpose.msra.mxu0 0.0
    %534 = vmatprep.subr.mxu0 0.0
    %535 = vmatpush1.xpose.msra.mxu0 0.0
    %536 = vmatprep.subr.mxu0 0.0
    %537 = vmatpush1.xpose.msra.mxu0 0.0
    %538 = vmatprep.subr.mxu0 0.0
    %539 = vmatpush1.xpose.msra.mxu0 0.0
    %540 = vmatprep.subr.mxu0 0.0
    %541 = vmatpush1.xpose.msra.mxu0 0.0
    %542 = vmatprep.subr.mxu0 0.0
    %543 = vmatpush1.xpose.msra.mxu0 0.0
    %544 = vmatprep.subr.mxu0 0.0
    %545 = vmatpush1.xpose.msra.mxu0 0.0
    %546 = vmatprep.subr.mxu0 0.0
    %547 = vmatpush1.xpose.msra.mxu0 0.0
    %548 = vmatprep.subr.mxu0 0.0
    %549 = vmatpush1.xpose.msra.mxu0 0.0
    %550 = vmatprep.subr.mxu0 0.0
    %551 = vmatpush1.xpose.msra.mxu0 0.0
    %552 = vmatprep.subr.mxu0 0.0
    %553 = vmatpush1.xpose.msra.mxu0 0.0
    %554 = vmatprep.subr.mxu0 0.0
    %555 = vmatpush1.xpose.msra.mxu0 0.0
    %556 = vmatprep.subr.mxu0 0.0
    %557 = vmatpush1.xpose.msra.mxu0 0.0
    %558 = vmatprep.subr.mxu0 0.0
    %559 = vmatpush1.xpose.msra.mxu0 0.0
    %560 = vmatprep.subr.mxu0 0.0
    %561 = vmatpush1.xpose.msra.mxu0 0.0
    %562 = vmatprep.subr.mxu0 0.0
    %563 = vmatpush1.xpose.msra.mxu0 0.0
    %564 = vmatprep.subr.mxu0 0.0
    %565 = vmatpush1.xpose.msra.mxu0 0.0
    %566 = vmatprep.subr.mxu0 0.0
    %567 = vmatpush1.xpose.msra.mxu0 0.0
    %568 = vmatprep.subr.mxu0 0.0
    %569 = vmatpush1.xpose.msra.mxu0 0.0
    %570 = vmatprep.subr.mxu0 0.0
    %571 = vmatpush1.xpose.msra.mxu0 0.0
    %572 = vmatprep.subr.mxu0 0.0
    %573 = vmatpush1.xpose.msra.mxu0 0.0
    %574 = vmatprep.subr.mxu0 0.0
    %575 = vmatpush1.xpose.msra.mxu0 0.0
    %576 = vmatprep.subr.mxu0 0.0
    %577 = vmatpush1.xpose.msra.mxu0 0.0
    %578 = vmatprep.mubr.f32.mxu0 0.0
    %579 = vmatmul.mubr.f32.gmra.mrb[0].mxu0 %v510
    %v580 = vpop.f32.mrb[0].mxu0
    %v581 = vadd.f32 %v171, %v580
    %v582 = vpop.f32.mrb[0].mxu0
    %583 = vdwg.mxu0
    %584 = vrot.lane.b32.xlu0 %v168, 120
    %v585 = vpop.permute.xlu0 %584
    %586 = vrot.lane.b32.xlu0 %v168, 88
    %v587 = vpop.permute.xlu0 %586
    %v588 = vsel %vm180, %v585, 0
    %v590 = vsel %vm180, %v587, 0
    %592 = vmatprep.subr.mxu0 0.0
    %593 = vmatpush1.xpose.msra.mxu0 %v590
    %594 = vmatprep.subr.mxu0 0.0
    %595 = vmatpush1.xpose.msra.mxu0 0.0
    %596 = vmatprep.subr.mxu0 0.0
    %597 = vmatpush1.xpose.msra.mxu0 0.0
    %598 = vmatprep.subr.mxu0 0.0
    %599 = vmatpush1.xpose.msra.mxu0 0.0
    %600 = vmatprep.subr.mxu0 0.0
    %601 = vmatpush1.xpose.msra.mxu0 0.0
    %602 = vmatprep.subr.mxu0 0.0
    %603 = vmatpush1.xpose.msra.mxu0 0.0
    %604 = vmatprep.subr.mxu0 0.0
    %605 = vmatpush1.xpose.msra.mxu0 0.0
    %606 = vmatprep.subr.mxu0 0.0
    %607 = vmatpush1.xpose.msra.mxu0 0.0
    %608 = vmatprep.subr.mxu0 0.0
    %609 = vmatpush1.xpose.msra.mxu0 0.0
    %610 = vmatprep.subr.mxu0 0.0
    %611 = vmatpush1.xpose.msra.mxu0 0.0
    %612 = vmatprep.subr.mxu0 0.0
    %613 = vmatpush1.xpose.msra.mxu0 0.0
    %614 = vmatprep.subr.mxu0 0.0
    %615 = vmatpush1.xpose.msra.mxu0 0.0
    %616 = vmatprep.subr.mxu0 0.0
    %617 = vmatpush1.xpose.msra.mxu0 0.0
    %618 = vmatprep.subr.mxu0 0.0
    %619 = vmatpush1.xpose.msra.mxu0 0.0
    %620 = vmatprep.subr.mxu0 0.0
    %621 = vmatpush1.xpose.msra.mxu0 0.0
    %622 = vmatprep.subr.mxu0 0.0
    %623 = vmatpush1.xpose.msra.mxu0 0.0
    %624 = vmatprep.subr.mxu0 0.0
    %625 = vmatpush1.xpose.msra.mxu0 0.0
    %626 = vmatprep.subr.mxu0 0.0
    %627 = vmatpush1.xpose.msra.mxu0 0.0
    %628 = vmatprep.subr.mxu0 0.0
    %629 = vmatpush1.xpose.msra.mxu0 0.0
    %630 = vmatprep.subr.mxu0 0.0
    %631 = vmatpush1.xpose.msra.mxu0 0.0
    %632 = vmatprep.subr.mxu0 0.0
    %633 = vmatpush1.xpose.msra.mxu0 0.0
    %634 = vmatprep.subr.mxu0 0.0
    %635 = vmatpush1.xpose.msra.mxu0 0.0
    %636 = vmatprep.subr.mxu0 0.0
    %637 = vmatpush1.xpose.msra.mxu0 0.0
    %638 = vmatprep.subr.mxu0 0.0
    %639 = vmatpush1.xpose.msra.mxu0 0.0
    %640 = vmatprep.subr.mxu0 0.0
    %641 = vmatpush1.xpose.msra.mxu0 0.0
    %642 = vmatprep.subr.mxu0 0.0
    %643 = vmatpush1.xpose.msra.mxu0 0.0
    %644 = vmatprep.subr.mxu0 0.0
    %645 = vmatpush1.xpose.msra.mxu0 0.0
    %646 = vmatprep.subr.mxu0 0.0
    %647 = vmatpush1.xpose.msra.mxu0 0.0
    %648 = vmatprep.subr.mxu0 0.0
    %649 = vmatpush1.xpose.msra.mxu0 0.0
    %650 = vmatprep.subr.mxu0 0.0
    %651 = vmatpush1.xpose.msra.mxu0 0.0
    %652 = vmatprep.subr.mxu0 0.0
    %653 = vmatpush1.xpose.msra.mxu0 0.0
    %654 = vmatprep.subr.mxu0 0.0
    %655 = vmatpush1.xpose.msra.mxu0 0.0
    %656 = vmatprep.mubr.f32.mxu0 0.0
    %657 = vmatmul.mubr.f32.gmra.mrb[0].mxu0 %v588
    %v658 = vpop.f32.mrb[0].mxu0
    %v659 = vadd.f32 %v172, %v658
    %v660 = vpop.f32.mrb[0].mxu0
    %661 = vdwg.mxu0
    %v662 = vsel %vm180, %v581, -inf
    %663 = vmax.xlane.f32.xlu0 %v662
    %v664 = vpop.xlane.xlu0 %663
    %v665 = vsel %vm180, %v659, -inf
    %666 = vmax.xlane.f32.xlu0 %v665
    %v667 = vpop.xlane.xlu0 %666
    %v668 = vsub.f32 %v581, %v664
    %v669 = vsub.f32 %v659, %v667
    %v670 = vmul.f32 %v668, 1.442695
    %v671 = vpow.pop %v670
    %v672 = vmul.f32 %v669, 1.442695
    %v673 = vpow.pop %v672
    %v674 = vsel %vm180, %v671, 0.0
    %675 = vadd.xlane.f32.xlu0 %v674
    %v676 = vpop.xlane.xlu0 %675
    %v677 = vsel %vm180, %v673, 0.0
    %678 = vadd.xlane.f32.xlu0 %v677
    %v679 = vpop.xlane.xlu0 %678
    %v680 = vrcp.pop %v676
    %v681 = vrcp.pop %v679
    %v682 = vmul.f32 %v671, %v680
    %v683 = vmul.f32 %v673, %v681
    %684 = vrot.lane.b32.xlu0 %v163, 56
    %v685 = vpop.permute.xlu0 %684
    %v688 = vsel %vm180, %v682, 0
    %690 = vmatprep.subr.mxu0 0.0
    %691 = vmatpush1.msra.mxu0 %v685
    %692 = vmatprep.subr.mxu0 0.0
    %693 = vmatpush1.msra.mxu0 0.0
    %694 = vmatprep.subr.mxu0 0.0
    %695 = vmatpush1.msra.mxu0 0.0
    %696 = vmatprep.subr.mxu0 0.0
    %697 = vmatpush1.msra.mxu0 0.0
    %698 = vmatprep.subr.mxu0 0.0
    %699 = vmatpush1.msra.mxu0 0.0
    %700 = vmatprep.subr.mxu0 0.0
    %701 = vmatpush1.msra.mxu0 0.0
    %702 = vmatprep.subr.mxu0 0.0
    %703 = vmatpush1.msra.mxu0 0.0
    %704 = vmatprep.subr.mxu0 0.0
    %705 = vmatpush1.msra.mxu0 0.0
    %706 = vmatprep.subr.mxu0 0.0
    %707 = vmatpush1.msra.mxu0 0.0
    %708 = vmatprep.subr.mxu0 0.0
    %709 = vmatpush1.msra.mxu0 0.0
    %710 = vmatprep.subr.mxu0 0.0
    %711 = vmatpush1.msra.mxu0 0.0
    %712 = vmatprep.subr.mxu0 0.0
    %713 = vmatpush1.msra.mxu0 0.0
    %714 = vmatprep.subr.mxu0 0.0
    %715 = vmatpush1.msra.mxu0 0.0
    %716 = vmatprep.subr.mxu0 0.0
    %717 = vmatpush1.msra.mxu0 0.0
    %718 = vmatprep.subr.mxu0 0.0
    %719 = vmatpush1.msra.mxu0 0.0
    %720 = vmatprep.subr.mxu0 0.0
    %721 = vmatpush1.msra.mxu0 0.0
    %722 = vmatprep.subr.mxu0 0.0
    %723 = vmatpush1.msra.mxu0 0.0
    %724 = vmatprep.subr.mxu0 0.0
    %725 = vmatpush1.msra.mxu0 0.0
    %726 = vmatprep.subr.mxu0 0.0
    %727 = vmatpush1.msra.mxu0 0.0
    %728 = vmatprep.subr.mxu0 0.0
    %729 = vmatpush1.msra.mxu0 0.0
    %730 = vmatprep.subr.mxu0 0.0
    %731 = vmatpush1.msra.mxu0 0.0
    %732 = vmatprep.subr.mxu0 0.0
    %733 = vmatpush1.msra.mxu0 0.0
    %734 = vmatprep.subr.mxu0 0.0
    %735 = vmatpush1.msra.mxu0 0.0
    %736 = vmatprep.subr.mxu0 0.0
    %737 = vmatpush1.msra.mxu0 0.0
    %738 = vmatprep.subr.mxu0 0.0
    %739 = vmatpush1.msra.mxu0 0.0
    %740 = vmatprep.subr.mxu0 0.0
    %741 = vmatpush1.msra.mxu0 0.0
    %742 = vmatprep.subr.mxu0 0.0
    %743 = vmatpush1.msra.mxu0 0.0
    %744 = vmatprep.subr.mxu0 0.0
    %745 = vmatpush1.msra.mxu0 0.0
    %746 = vmatprep.subr.mxu0 0.0
    %747 = vmatpush1.msra.mxu0 0.0
    %748 = vmatprep.subr.mxu0 0.0
    %749 = vmatpush1.msra.mxu0 0.0
    %750 = vmatprep.subr.mxu0 0.0
    %751 = vmatpush1.msra.mxu0 0.0
    %752 = vmatprep.subr.mxu0 0.0
    %753 = vmatpush1.msra.mxu0 0.0
    %754 = vmatprep.mubr.f32.mxu0 0.0
    %755 = vmatmul.mubr.f32.gmra.mrb[0].mxu0 %v688
    %v756 = vpop.f32.mrb[0].mxu0
    %v757 = vadd.f32 0.0, %v756
    %v758 = vpop.f32.mrb[0].mxu0
    %759 = vdwg.mxu0
    %760 = vrot.lane.b32.xlu0 %v168, 56
    %v761 = vpop.permute.xlu0 %760
    %v764 = vsel %vm180, %v683, 0
    %766 = vmatprep.subr.mxu0 0.0
    %767 = vmatpush1.msra.mxu0 %v761
    %768 = vmatprep.subr.mxu0 0.0
    %769 = vmatpush1.msra.mxu0 0.0
    %770 = vmatprep.subr.mxu0 0.0
    %771 = vmatpush1.msra.mxu0 0.0
    %772 = vmatprep.subr.mxu0 0.0
    %773 = vmatpush1.msra.mxu0 0.0
    %774 = vmatprep.subr.mxu0 0.0
    %775 = vmatpush1.msra.mxu0 0.0
    %776 = vmatprep.subr.mxu0 0.0
    %777 = vmatpush1.msra.mxu0 0.0
    %778 = vmatprep.subr.mxu0 0.0
    %779 = vmatpush1.msra.mxu0 0.0
    %780 = vmatprep.subr.mxu0 0.0
    %781 = vmatpush1.msra.mxu0 0.0
    %782 = vmatprep.subr.mxu0 0.0
    %783 = vmatpush1.msra.mxu0 0.0
    %784 = vmatprep.subr.mxu0 0.0
    %785 = vmatpush1.msra.mxu0 0.0
    %786 = vmatprep.subr.mxu0 0.0
    %787 = vmatpush1.msra.mxu0 0.0
    %788 = vmatprep.subr.mxu0 0.0
    %789 = vmatpush1.msra.mxu0 0.0
    %790 = vmatprep.subr.mxu0 0.0
    %791 = vmatpush1.msra.mxu0 0.0
    %792 = vmatprep.subr.mxu0 0.0
    %793 = vmatpush1.msra.mxu0 0.0
    %794 = vmatprep.subr.mxu0 0.0
    %795 = vmatpush1.msra.mxu0 0.0
    %796 = vmatprep.subr.mxu0 0.0
    %797 = vmatpush1.msra.mxu0 0.0
    %798 = vmatprep.subr.mxu0 0.0
    %799 = vmatpush1.msra.mxu0 0.0
    %800 = vmatprep.subr.mxu0 0.0
    %801 = vmatpush1.msra.mxu0 0.0
    %802 = vmatprep.subr.mxu0 0.0
    %803 = vmatpush1.msra.mxu0 0.0
    %804 = vmatprep.subr.mxu0 0.0
    %805 = vmatpush1.msra.mxu0 0.0
    %806 = vmatprep.subr.mxu0 0.0
    %807 = vmatpush1.msra.mxu0 0.0
    %808 = vmatprep.subr.mxu0 0.0
    %809 = vmatpush1.msra.mxu0 0.0
    %810 = vmatprep.subr.mxu0 0.0
    %811 = vmatpush1.msra.mxu0 0.0
    %812 = vmatprep.subr.mxu0 0.0
    %813 = vmatpush1.msra.mxu0 0.0
    %814 = vmatprep.subr.mxu0 0.0
    %815 = vmatpush1.msra.mxu0 0.0
    %816 = vmatprep.subr.mxu0 0.0
    %817 = vmatpush1.msra.mxu0 0.0
    %818 = vmatprep.subr.mxu0 0.0
    %819 = vmatpush1.msra.mxu0 0.0
    %820 = vmatprep.subr.mxu0 0.0
    %821 = vmatpush1.msra.mxu0 0.0
    %822 = vmatprep.subr.mxu0 0.0
    %823 = vmatpush1.msra.mxu0 0.0
    %824 = vmatprep.subr.mxu0 0.0
    %825 = vmatpush1.msra.mxu0 0.0
    %826 = vmatprep.subr.mxu0 0.0
    %827 = vmatpush1.msra.mxu0 0.0
    %828 = vmatprep.subr.mxu0 0.0
    %829 = vmatpush1.msra.mxu0 0.0
    %830 = vmatprep.mubr.f32.mxu0 0.0
    %831 = vmatmul.mubr.f32.gmra.mrb[0].mxu0 %v764
    %v832 = vpop.f32.mrb[0].mxu0
    %v833 = vadd.f32 0.0, %v832
    %v834 = vpop.f32.mrb[0].mxu0
    %835 = vdwg.mxu0
    %v837 = vsel %vm180, %v757, 0
    %v840 = vsel %vm180, %v833, 0
    %842 = vmatprep.subr.mxu0 0.0
    %843 = vmatpush1.msra.mxu0 %v174
    %844 = vmatprep.subr.mxu0 0.0
    %845 = vmatpush1.msra.mxu0 0.0
    %846 = vmatprep.subr.mxu0 0.0
    %847 = vmatpush1.msra.mxu0 0.0
    %848 = vmatprep.subr.mxu0 0.0
    %849 = vmatpush1.msra.mxu0 0.0
    %850 = vmatprep.subr.mxu0 0.0
    %851 = vmatpush1.msra.mxu0 0.0
    %852 = vmatprep.subr.mxu0 0.0
    %853 = vmatpush1.msra.mxu0 0.0
    %854 = vmatprep.subr.mxu0 0.0
    %855 = vmatpush1.msra.mxu0 0.0
    %856 = vmatprep.subr.mxu0 0.0
    %857 = vmatpush1.msra.mxu0 0.0
    %858 = vmatprep.subr.mxu0 0.0
    %859 = vmatpush1.msra.mxu0 0.0
    %860 = vmatprep.subr.mxu0 0.0
    %861 = vmatpush1.msra.mxu0 0.0
    %862 = vmatprep.subr.mxu0 0.0
    %863 = vmatpush1.msra.mxu0 0.0
    %864 = vmatprep.subr.mxu0 0.0
    %865 = vmatpush1.msra.mxu0 0.0
    %866 = vmatprep.subr.mxu0 0.0
    %867 = vmatpush1.msra.mxu0 0.0
    %868 = vmatprep.subr.mxu0 0.0
    %869 = vmatpush1.msra.mxu0 0.0
    %870 = vmatprep.subr.mxu0 0.0
    %871 = vmatpush1.msra.mxu0 0.0
    %872 = vmatprep.subr.mxu0 0.0
    %873 = vmatpush1.msra.mxu0 0.0
    %874 = vmatprep.subr.mxu0 0.0
    %875 = vmatpush1.msra.mxu0 0.0
    %876 = vmatprep.subr.mxu0 0.0
    %877 = vmatpush1.msra.mxu0 0.0
    %878 = vmatprep.subr.mxu0 0.0
    %879 = vmatpush1.msra.mxu0 0.0
    %880 = vmatprep.subr.mxu0 0.0
    %881 = vmatpush1.msra.mxu0 0.0
    %882 = vmatprep.subr.mxu0 0.0
    %883 = vmatpush1.msra.mxu0 0.0
    %884 = vmatprep.subr.mxu0 0.0
    %885 = vmatpush1.msra.mxu0 0.0
    %886 = vmatprep.subr.mxu0 0.0
    %887 = vmatpush1.msra.mxu0 0.0
    %888 = vmatprep.subr.mxu0 0.0
    %889 = vmatpush1.msra.mxu0 0.0
    %890 = vmatprep.subr.mxu0 0.0
    %891 = vmatpush1.msra.mxu0 0.0
    %892 = vmatprep.subr.mxu0 0.0
    %893 = vmatpush1.msra.mxu0 0.0
    %894 = vmatprep.subr.mxu0 0.0
    %895 = vmatpush1.msra.mxu0 0.0
    %896 = vmatprep.subr.mxu0 0.0
    %897 = vmatpush1.msra.mxu0 0.0
    %898 = vmatprep.subr.mxu0 0.0
    %899 = vmatpush1.msra.mxu0 0.0
    %900 = vmatprep.subr.mxu0 0.0
    %901 = vmatpush1.msra.mxu0 0.0
    %902 = vmatprep.subr.mxu0 0.0
    %903 = vmatpush1.msra.mxu0 0.0
    %904 = vmatprep.subr.mxu0 0.0
    %905 = vmatpush1.msra.mxu0 0.0
    %906 = vmatprep.mubr.f32.mxu0 0.0
    %907 = vmatmul.mubr.f32.gmra.mrb[0].mxu0 %v837
    %v908 = vpop.f32.mrb[0].mxu0
    %v909 = vadd.f32 0.0, %v908
    %v910 = vpop.f32.mrb[0].mxu0
    %911 = vmatprep.mubr.f32.mxu0 0.0
    %912 = vmatmul.mubr.f32.gmra.mrb[0].mxu0 %v840
    %v913 = vpop.f32.mrb[0].mxu0
    %v914 = vadd.f32 0.0, %v913
    %v915 = vpop.f32.mrb[0].mxu0
    %916 = vdwg.mxu0
    %v918 = vsel %vm180, %v427, 0
    %v921 = vsel %vm180, %v503, 0
    %923 = vmatprep.subr.mxu0 0.0
    %924 = vmatpush1.msra.mxu0 %v173
    %925 = vmatprep.subr.mxu0 0.0
    %926 = vmatpush1.msra.mxu0 0.0
    %927 = vmatprep.subr.mxu0 0.0
    %928 = vmatpush1.msra.mxu0 0.0
    %929 = vmatprep.subr.mxu0 0.0
    %930 = vmatpush1.msra.mxu0 0.0
    %931 = vmatprep.subr.mxu0 0.0
    %932 = vmatpush1.msra.mxu0 0.0
    %933 = vmatprep.subr.mxu0 0.0
    %934 = vmatpush1.msra.mxu0 0.0
    %935 = vmatprep.subr.mxu0 0.0
    %936 = vmatpush1.msra.mxu0 0.0
    %937 = vmatprep.subr.mxu0 0.0
    %938 = vmatpush1.msra.mxu0 0.0
    %939 = vmatprep.subr.mxu0 0.0
    %940 = vmatpush1.msra.mxu0 0.0
    %941 = vmatprep.subr.mxu0 0.0
    %942 = vmatpush1.msra.mxu0 0.0
    %943 = vmatprep.subr.mxu0 0.0
    %944 = vmatpush1.msra.mxu0 0.0
    %945 = vmatprep.subr.mxu0 0.0
    %946 = vmatpush1.msra.mxu0 0.0
    %947 = vmatprep.subr.mxu0 0.0
    %948 = vmatpush1.msra.mxu0 0.0
    %949 = vmatprep.subr.mxu0 0.0
    %950 = vmatpush1.msra.mxu0 0.0
    %951 = vmatprep.subr.mxu0 0.0
    %952 = vmatpush1.msra.mxu0 0.0
    %953 = vmatprep.subr.mxu0 0.0
    %954 = vmatpush1.msra.mxu0 0.0
    %955 = vmatprep.subr.mxu0 0.0
    %956 = vmatpush1.msra.mxu0 0.0
    %957 = vmatprep.subr.mxu0 0.0
    %958 = vmatpush1.msra.mxu0 0.0
    %959 = vmatprep.subr.mxu0 0.0
    %960 = vmatpush1.msra.mxu0 0.0
    %961 = vmatprep.subr.mxu0 0.0
    %962 = vmatpush1.msra.mxu0 0.0
    %963 = vmatprep.subr.mxu0 0.0
    %964 = vmatpush1.msra.mxu0 0.0
    %965 = vmatprep.subr.mxu0 0.0
    %966 = vmatpush1.msra.mxu0 0.0
    %967 = vmatprep.subr.mxu0 0.0
    %968 = vmatpush1.msra.mxu0 0.0
    %969 = vmatprep.subr.mxu0 0.0
    %970 = vmatpush1.msra.mxu0 0.0
    %971 = vmatprep.subr.mxu0 0.0
    %972 = vmatpush1.msra.mxu0 0.0
    %973 = vmatprep.subr.mxu0 0.0
    %974 = vmatpush1.msra.mxu0 0.0
    %975 = vmatprep.subr.mxu0 0.0
    %976 = vmatpush1.msra.mxu0 0.0
    %977 = vmatprep.subr.mxu0 0.0
    %978 = vmatpush1.msra.mxu0 0.0
    %979 = vmatprep.subr.mxu0 0.0
    %980 = vmatpush1.msra.mxu0 0.0
    %981 = vmatprep.subr.mxu0 0.0
    %982 = vmatpush1.msra.mxu0 0.0
    %983 = vmatprep.subr.mxu0 0.0
    %984 = vmatpush1.msra.mxu0 0.0
    %985 = vmatprep.subr.mxu0 0.0
    %986 = vmatpush1.msra.mxu0 0.0
    %987 = vmatprep.mubr.f32.mxu0 0.0
    %988 = vmatmul.mubr.f32.gmra.mrb[0].mxu0 %v918
    %v989 = vpop.f32.mrb[0].mxu0
    %v990 = vadd.f32 %v909, %v989
    %v991 = vpop.f32.mrb[0].mxu0
    %992 = vmatprep.mubr.f32.mxu0 0.0
    %993 = vmatmul.mubr.f32.gmra.mrb[0].mxu0 %v921
    %v994 = vpop.f32.mrb[0].mxu0
    %v995 = vadd.f32 %v914, %v994
    %v996 = vpop.f32.mrb[0].mxu0
    %997 = vdwg.mxu0
    %998 = vrot.lane.b32.xlu0 %v163, 112
    %v999 = vpop.permute.xlu0 %998
    %1000 = vrot.lane.b32.xlu0 %v163, 80
    %v1001 = vpop.permute.xlu0 %1000
    %v1002 = vsel %vm180, %v999, 0
    %v1004 = vsel %vm180, %v1001, 0
    %1006 = vmatprep.subr.mxu0 0.0
    %1007 = vmatpush1.xpose.msra.mxu0 %v1004
    %1008 = vmatprep.subr.mxu0 0.0
    %1009 = vmatpush1.xpose.msra.mxu0 0.0
    %1010 = vmatprep.subr.mxu0 0.0
    %1011 = vmatpush1.xpose.msra.mxu0 0.0
    %1012 = vmatprep.subr.mxu0 0.0
    %1013 = vmatpush1.xpose.msra.mxu0 0.0
    %1014 = vmatprep.subr.mxu0 0.0
    %1015 = vmatpush1.xpose.msra.mxu0 0.0
    %1016 = vmatprep.subr.mxu0 0.0
    %1017 = vmatpush1.xpose.msra.mxu0 0.0
    %1018 = vmatprep.subr.mxu0 0.0
    %1019 = vmatpush1.xpose.msra.mxu0 0.0
    %1020 = vmatprep.subr.mxu0 0.0
    %1021 = vmatpush1.xpose.msra.mxu0 0.0
    %1022 = vmatprep.subr.mxu0 0.0
    %1023 = vmatpush1.xpose.msra.mxu0 0.0
    %1024 = vmatprep.subr.mxu0 0.0
    %1025 = vmatpush1.xpose.msra.mxu0 0.0
    %1026 = vmatprep.subr.mxu0 0.0
    %1027 = vmatpush1.xpose.msra.mxu0 0.0
    %1028 = vmatprep.subr.mxu0 0.0
    %1029 = vmatpush1.xpose.msra.mxu0 0.0
    %1030 = vmatprep.subr.mxu0 0.0
    %1031 = vmatpush1.xpose.msra.mxu0 0.0
    %1032 = vmatprep.subr.mxu0 0.0
    %1033 = vmatpush1.xpose.msra.mxu0 0.0
    %1034 = vmatprep.subr.mxu0 0.0
    %1035 = vmatpush1.xpose.msra.mxu0 0.0
    %1036 = vmatprep.subr.mxu0 0.0
    %1037 = vmatpush1.xpose.msra.mxu0 0.0
    %1038 = vmatprep.subr.mxu0 0.0
    %1039 = vmatpush1.xpose.msra.mxu0 0.0
    %1040 = vmatprep.subr.mxu0 0.0
    %1041 = vmatpush1.xpose.msra.mxu0 0.0
    %1042 = vmatprep.subr.mxu0 0.0
    %1043 = vmatpush1.xpose.msra.mxu0 0.0
    %1044 = vmatprep.subr.mxu0 0.0
    %1045 = vmatpush1.xpose.msra.mxu0 0.0
    %1046 = vmatprep.subr.mxu0 0.0
    %1047 = vmatpush1.xpose.msra.mxu0 0.0
    %1048 = vmatprep.subr.mxu0 0.0
    %1049 = vmatpush1.xpose.msra.mxu0 0.0
    %1050 = vmatprep.subr.mxu0 0.0
    %1051 = vmatpush1.xpose.msra.mxu0 0.0
    %1052 = vmatprep.subr.mxu0 0.0
    %1053 = vmatpush1.xpose.msra.mxu0 0.0
    %1054 = vmatprep.subr.mxu0 0.0
    %1055 = vmatpush1.xpose.msra.mxu0 0.0
    %1056 = vmatprep.subr.mxu0 0.0
    %1057 = vmatpush1.xpose.msra.mxu0 0.0
    %1058 = vmatprep.subr.mxu0 0.0
    %1059 = vmatpush1.xpose.msra.mxu0 0.0
    %1060 = vmatprep.subr.mxu0 0.0
    %1061 = vmatpush1.xpose.msra.mxu0 0.0
    %1062 = vmatprep.subr.mxu0 0.0
    %1063 = vmatpush1.xpose.msra.mxu0 0.0
    %1064 = vmatprep.subr.mxu0 0.0
    %1065 = vmatpush1.xpose.msra.mxu0 0.0
    %1066 = vmatprep.subr.mxu0 0.0
    %1067 = vmatpush1.xpose.msra.mxu0 0.0
    %1068 = vmatprep.subr.mxu0 0.0
    %1069 = vmatpush1.xpose.msra.mxu0 0.0
    %1070 = vmatprep.mubr.f32.mxu0 0.0
    %1071 = vmatmul.mubr.f32.gmra.mrb[0].mxu0 %v1002
    %v1072 = vpop.f32.mrb[0].mxu0
    %v1073 = vadd.f32 %v171, %v1072
    %v1074 = vpop.f32.mrb[0].mxu0
    %1075 = vdwg.mxu0
    %1076 = vrot.lane.b32.xlu0 %v168, 112
    %v1077 = vpop.permute.xlu0 %1076
    %1078 = vrot.lane.b32.xlu0 %v168, 80
    %v1079 = vpop.permute.xlu0 %1078
    %v1080 = vsel %vm180, %v1077, 0
    %v1082 = vsel %vm180, %v1079, 0
    %1084 = vmatprep.subr.mxu0 0.0
    %1085 = vmatpush1.xpose.msra.mxu0 %v1082
    %1086 = vmatprep.subr.mxu0 0.0
    %1087 = vmatpush1.xpose.msra.mxu0 0.0
    %1088 = vmatprep.subr.mxu0 0.0
    %1089 = vmatpush1.xpose.msra.mxu0 0.0
    %1090 = vmatprep.subr.mxu0 0.0
    %1091 = vmatpush1.xpose.msra.mxu0 0.0
    %1092 = vmatprep.subr.mxu0 0.0
    %1093 = vmatpush1.xpose.msra.mxu0 0.0
    %1094 = vmatprep.subr.mxu0 0.0
    %1095 = vmatpush1.xpose.msra.mxu0 0.0
    %1096 = vmatprep.subr.mxu0 0.0
    %1097 = vmatpush1.xpose.msra.mxu0 0.0
    %1098 = vmatprep.subr.mxu0 0.0
    %1099 = vmatpush1.xpose.msra.mxu0 0.0
    %1100 = vmatprep.subr.mxu0 0.0
    %1101 = vmatpush1.xpose.msra.mxu0 0.0
    %1102 = vmatprep.subr.mxu0 0.0
    %1103 = vmatpush1.xpose.msra.mxu0 0.0
    %1104 = vmatprep.subr.mxu0 0.0
    %1105 = vmatpush1.xpose.msra.mxu0 0.0
    %1106 = vmatprep.subr.mxu0 0.0
    %1107 = vmatpush1.xpose.msra.mxu0 0.0
    %1108 = vmatprep.subr.mxu0 0.0
    %1109 = vmatpush1.xpose.msra.mxu0 0.0
    %1110 = vmatprep.subr.mxu0 0.0
    %1111 = vmatpush1.xpose.msra.mxu0 0.0
    %1112 = vmatprep.subr.mxu0 0.0
    %1113 = vmatpush1.xpose.msra.mxu0 0.0
    %1114 = vmatprep.subr.mxu0 0.0
    %1115 = vmatpush1.xpose.msra.mxu0 0.0
    %1116 = vmatprep.subr.mxu0 0.0
    %1117 = vmatpush1.xpose.msra.mxu0 0.0
    %1118 = vmatprep.subr.mxu0 0.0
    %1119 = vmatpush1.xpose.msra.mxu0 0.0
    %1120 = vmatprep.subr.mxu0 0.0
    %1121 = vmatpush1.xpose.msra.mxu0 0.0
    %1122 = vmatprep.subr.mxu0 0.0
    %1123 = vmatpush1.xpose.msra.mxu0 0.0
    %1124 = vmatprep.subr.mxu0 0.0
    %1125 = vmatpush1.xpose.msra.mxu0 0.0
    %1126 = vmatprep.subr.mxu0 0.0
    %1127 = vmatpush1.xpose.msra.mxu0 0.0
    %1128 = vmatprep.subr.mxu0 0.0
    %1129 = vmatpush1.xpose.msra.mxu0 0.0
    %1130 = vmatprep.subr.mxu0 0.0
    %1131 = vmatpush1.xpose.msra.mxu0 0.0
    %1132 = vmatprep.subr.mxu0 0.0
    %1133 = vmatpush1.xpose.msra.mxu0 0.0
    %1134 = vmatprep.subr.mxu0 0.0
    %1135 = vmatpush1.xpose.msra.mxu0 0.0
    %1136 = vmatprep.subr.mxu0 0.0
    %1137 = vmatpush1.xpose.msra.mxu0 0.0
    %1138 = vmatprep.subr.mxu0 0.0
    %1139 = vmatpush1.xpose.msra.mxu0 0.0
    %1140 = vmatprep.subr.mxu0 0.0
    %1141 = vmatpush1.xpose.msra.mxu0 0.0
    %1142 = vmatprep.subr.mxu0 0.0
    %1143 = vmatpush1.xpose.msra.mxu0 0.0
    %1144 = vmatprep.subr.mxu0 0.0
    %1145 = vmatpush1.xpose.msra.mxu0 0.0
    %1146 = vmatprep.subr.mxu0 0.0
    %1147 = vmatpush1.xpose.msra.mxu0 0.0
    %1148 = vmatprep.mubr.f32.mxu0 0.0
    %1149 = vmatmul.mubr.f32.gmra.mrb[0].mxu0 %v1080
    %v1150 = vpop.f32.mrb[0].mxu0
    %v1151 = vadd.f32 %v172, %v1150
    %v1152 = vpop.f32.mrb[0].mxu0
    %1153 = vdwg.mxu0
    %v1154 = vsel %vm180, %v1073, -inf
    %1155 = vmax.xlane.f32.xlu0 %v1154
    %v1156 = vpop.xlane.xlu0 %1155
    %v1157 = vsel %vm180, %v1151, -inf
    %1158 = vmax.xlane.f32.xlu0 %v1157
    %v1159 = vpop.xlane.xlu0 %1158
    %v1160 = vsub.f32 %v1073, %v1156
    %v1161 = vsub.f32 %v1151, %v1159
    %v1162 = vmul.f32 %v1160, 1.442695
    %v1163 = vpow.pop %v1162
    %v1164 = vmul.f32 %v1161, 1.442695
    %v1165 = vpow.pop %v1164
    %v1166 = vsel %vm180, %v1163, 0.0
    %1167 = vadd.xlane.f32.xlu0 %v1166
    %v1168 = vpop.xlane.xlu0 %1167
    %v1169 = vsel %vm180, %v1165, 0.0
    %1170 = vadd.xlane.f32.xlu0 %v1169
    %v1171 = vpop.xlane.xlu0 %1170
    %v1172 = vrcp.pop %v1168
    %v1173 = vrcp.pop %v1171
    %v1174 = vmul.f32 %v1163, %v1172
    %v1175 = vmul.f32 %v1165, %v1173
    %1176 = vrot.lane.b32.xlu0 %v163, 48
    %v1177 = vpop.permute.xlu0 %1176
    %v1180 = vsel %vm180, %v1174, 0
    %1182 = vmatprep.subr.mxu0 0.0
    %1183 = vmatpush1.msra.mxu0 %v1177
    %1184 = vmatprep.subr.mxu0 0.0
    %1185 = vmatpush1.msra.mxu0 0.0
    %1186 = vmatprep.subr.mxu0 0.0
    %1187 = vmatpush1.msra.mxu0 0.0
    %1188 = vmatprep.subr.mxu0 0.0
    %1189 = vmatpush1.msra.mxu0 0.0
    %1190 = vmatprep.subr.mxu0 0.0
    %1191 = vmatpush1.msra.mxu0 0.0
    %1192 = vmatprep.subr.mxu0 0.0
    %1193 = vmatpush1.msra.mxu0 0.0
    %1194 = vmatprep.subr.mxu0 0.0
    %1195 = vmatpush1.msra.mxu0 0.0
    %1196 = vmatprep.subr.mxu0 0.0
    %1197 = vmatpush1.msra.mxu0 0.0
    %1198 = vmatprep.subr.mxu0 0.0
    %1199 = vmatpush1.msra.mxu0 0.0
    %1200 = vmatprep.subr.mxu0 0.0
    %1201 = vmatpush1.msra.mxu0 0.0
    %1202 = vmatprep.subr.mxu0 0.0
    %1203 = vmatpush1.msra.mxu0 0.0
    %1204 = vmatprep.subr.mxu0 0.0
    %1205 = vmatpush1.msra.mxu0 0.0
    %1206 = vmatprep.subr.mxu0 0.0
    %1207 = vmatpush1.msra.mxu0 0.0
    %1208 = vmatprep.subr.mxu0 0.0
    %1209 = vmatpush1.msra.mxu0 0.0
    %1210 = vmatprep.subr.mxu0 0.0
    %1211 = vmatpush1.msra.mxu0 0.0
    %1212 = vmatprep.subr.mxu0 0.0
    %1213 = vmatpush1.msra.mxu0 0.0
    %1214 = vmatprep.subr.mxu0 0.0
    %1215 = vmatpush1.msra.mxu0 0.0
    %1216 = vmatprep.subr.mxu0 0.0
    %1217 = vmatpush1.msra.mxu0 0.0
    %1218 = vmatprep.subr.mxu0 0.0
    %1219 = vmatpush1.msra.mxu0 0.0
    %1220 = vmatprep.subr.mxu0 0.0
    %1221 = vmatpush1.msra.mxu0 0.0
    %1222 = vmatprep.subr.mxu0 0.0
    %1223 = vmatpush1.msra.mxu0 0.0
    %1224 = vmatprep.subr.mxu0 0.0
    %1225 = vmatpush1.msra.mxu0 0.0
    %1226 = vmatprep.subr.mxu0 0.0
    %1227 = vmatpush1.msra.mxu0 0.0
    %1228 = vmatprep.subr.mxu0 0.0
    %1229 = vmatpush1.msra.mxu0 0.0
    %1230 = vmatprep.subr.mxu0 0.0
    %1231 = vmatpush1.msra.mxu0 0.0
    %1232 = vmatprep.subr.mxu0 0.0
    %1233 = vmatpush1.msra.mxu0 0.0
    %1234 = vmatprep.subr.mxu0 0.0
    %1235 = vmatpush1.msra.mxu0 0.0
    %1236 = vmatprep.subr.mxu0 0.0
    %1237 = vmatpush1.msra.mxu0 0.0
    %1238 = vmatprep.subr.mxu0 0.0
    %1239 = vmatpush1.msra.mxu0 0.0
    %1240 = vmatprep.subr.mxu0 0.0
    %1241 = vmatpush1.msra.mxu0 0.0
    %1242 = vmatprep.subr.mxu0 0.0
    %1243 = vmatpush1.msra.mxu0 0.0
    %1244 = vmatprep.subr.mxu0 0.0
    %1245 = vmatpush1.msra.mxu0 0.0
    %1246 = vmatprep.mubr.f32.mxu0 0.0
    %1247 = vmatmul.mubr.f32.gmra.mrb[0].mxu0 %v1180
    %v1248 = vpop.f32.mrb[0].mxu0
    %v1249 = vadd.f32 0.0, %v1248
    %v1250 = vpop.f32.mrb[0].mxu0
    %1251 = vdwg.mxu0
    %1252 = vrot.lane.b32.xlu0 %v168, 48
    %v1253 = vpop.permute.xlu0 %1252
    %v1256 = vsel %vm180, %v1175, 0
    %1258 = vmatprep.subr.mxu0 0.0
    %1259 = vmatpush1.msra.mxu0 %v1253
    %1260 = vmatprep.subr.mxu0 0.0
    %1261 = vmatpush1.msra.mxu0 0.0
    %1262 = vmatprep.subr.mxu0 0.0
    %1263 = vmatpush1.msra.mxu0 0.0
    %1264 = vmatprep.subr.mxu0 0.0
    %1265 = vmatpush1.msra.mxu0 0.0
    %1266 = vmatprep.subr.mxu0 0.0
    %1267 = vmatpush1.msra.mxu0 0.0
    %1268 = vmatprep.subr.mxu0 0.0
    %1269 = vmatpush1.msra.mxu0 0.0
    %1270 = vmatprep.subr.mxu0 0.0
    %1271 = vmatpush1.msra.mxu0 0.0
    %1272 = vmatprep.subr.mxu0 0.0
    %1273 = vmatpush1.msra.mxu0 0.0
    %1274 = vmatprep.subr.mxu0 0.0
    %1275 = vmatpush1.msra.mxu0 0.0
    %1276 = vmatprep.subr.mxu0 0.0
    %1277 = vmatpush1.msra.mxu0 0.0
    %1278 = vmatprep.subr.mxu0 0.0
    %1279 = vmatpush1.msra.mxu0 0.0
    %1280 = vmatprep.subr.mxu0 0.0
    %1281 = vmatpush1.msra.mxu0 0.0
    %1282 = vmatprep.subr.mxu0 0.0
    %1283 = vmatpush1.msra.mxu0 0.0
    %1284 = vmatprep.subr.mxu0 0.0
    %1285 = vmatpush1.msra.mxu0 0.0
    %1286 = vmatprep.subr.mxu0 0.0
    %1287 = vmatpush1.msra.mxu0 0.0
    %1288 = vmatprep.subr.mxu0 0.0
    %1289 = vmatpush1.msra.mxu0 0.0
    %1290 = vmatprep.subr.mxu0 0.0
    %1291 = vmatpush1.msra.mxu0 0.0
    %1292 = vmatprep.subr.mxu0 0.0
    %1293 = vmatpush1.msra.mxu0 0.0
    %1294 = vmatprep.subr.mxu0 0.0
    %1295 = vmatpush1.msra.mxu0 0.0
    %1296 = vmatprep.subr.mxu0 0.0
    %1297 = vmatpush1.msra.mxu0 0.0
    %1298 = vmatprep.subr.mxu0 0.0
    %1299 = vmatpush1.msra.mxu0 0.0
    %1300 = vmatprep.subr.mxu0 0.0
    %1301 = vmatpush1.msra.mxu0 0.0
    %1302 = vmatprep.subr.mxu0 0.0
    %1303 = vmatpush1.msra.mxu0 0.0
    %1304 = vmatprep.subr.mxu0 0.0
    %1305 = vmatpush1.msra.mxu0 0.0
    %1306 = vmatprep.subr.mxu0 0.0
    %1307 = vmatpush1.msra.mxu0 0.0
    %1308 = vmatprep.subr.mxu0 0.0
    %1309 = vmatpush1.msra.mxu0 0.0
    %1310 = vmatprep.subr.mxu0 0.0
    %1311 = vmatpush1.msra.mxu0 0.0
    %1312 = vmatprep.subr.mxu0 0.0
    %1313 = vmatpush1.msra.mxu0 0.0
    %1314 = vmatprep.subr.mxu0 0.0
    %1315 = vmatpush1.msra.mxu0 0.0
    %1316 = vmatprep.subr.mxu0 0.0
    %1317 = vmatpush1.msra.mxu0 0.0
    %1318 = vmatprep.subr.mxu0 0.0
    %1319 = vmatpush1.msra.mxu0 0.0
    %1320 = vmatprep.subr.mxu0 0.0
    %1321 = vmatpush1.msra.mxu0 0.0
    %1322 = vmatprep.mubr.f32.mxu0 0.0
    %1323 = vmatmul.mubr.f32.gmra.mrb[0].mxu0 %v1256
    %v1324 = vpop.f32.mrb[0].mxu0
    %v1325 = vadd.f32 0.0, %v1324
    %v1326 = vpop.f32.mrb[0].mxu0
    %1327 = vdwg.mxu0
    %v1329 = vsel %vm180, %v1249, 0
    %v1332 = vsel %vm180, %v1325, 0
    %1334 = vmatprep.subr.mxu0 0.0
    %1335 = vmatpush1.msra.mxu0 %v175
    %1336 = vmatprep.subr.mxu0 0.0
    %1337 = vmatpush1.msra.mxu0 0.0
    %1338 = vmatprep.subr.mxu0 0.0
    %1339 = vmatpush1.msra.mxu0 0.0
    %1340 = vmatprep.subr.mxu0 0.0
    %1341 = vmatpush1.msra.mxu0 0.0
    %1342 = vmatprep.subr.mxu0 0.0
    %1343 = vmatpush1.msra.mxu0 0.0
    %1344 = vmatprep.subr.mxu0 0.0
    %1345 = vmatpush1.msra.mxu0 0.0
    %1346 = vmatprep.subr.mxu0 0.0
    %1347 = vmatpush1.msra.mxu0 0.0
    %1348 = vmatprep.subr.mxu0 0.0
    %1349 = vmatpush1.msra.mxu0 0.0
    %1350 = vmatprep.subr.mxu0 0.0
    %1351 = vmatpush1.msra.mxu0 0.0
    %1352 = vmatprep.subr.mxu0 0.0
    %1353 = vmatpush1.msra.mxu0 0.0
    %1354 = vmatprep.subr.mxu0 0.0
    %1355 = vmatpush1.msra.mxu0 0.0
    %1356 = vmatprep.subr.mxu0 0.0
    %1357 = vmatpush1.msra.mxu0 0.0
    %1358 = vmatprep.subr.mxu0 0.0
    %1359 = vmatpush1.msra.mxu0 0.0
    %1360 = vmatprep.subr.mxu0 0.0
    %1361 = vmatpush1.msra.mxu0 0.0
    %1362 = vmatprep.subr.mxu0 0.0
    %1363 = vmatpush1.msra.mxu0 0.0
    %1364 = vmatprep.subr.mxu0 0.0
    %1365 = vmatpush1.msra.mxu0 0.0
    %1366 = vmatprep.subr.mxu0 0.0
    %1367 = vmatpush1.msra.mxu0 0.0
    %1368 = vmatprep.subr.mxu0 0.0
    %1369 = vmatpush1.msra.mxu0 0.0
    %1370 = vmatprep.subr.mxu0 0.0
    %1371 = vmatpush1.msra.mxu0 0.0
    %1372 = vmatprep.subr.mxu0 0.0
    %1373 = vmatpush1.msra.mxu0 0.0
    %1374 = vmatprep.subr.mxu0 0.0
    %1375 = vmatpush1.msra.mxu0 0.0
    %1376 = vmatprep.subr.mxu0 0.0
    %1377 = vmatpush1.msra.mxu0 0.0
    %1378 = vmatprep.subr.mxu0 0.0
    %1379 = vmatpush1.msra.mxu0 0.0
    %1380 = vmatprep.subr.mxu0 0.0
    %1381 = vmatpush1.msra.mxu0 0.0
    %1382 = vmatprep.subr.mxu0 0.0
    %1383 = vmatpush1.msra.mxu0 0.0
    %1384 = vmatprep.subr.mxu0 0.0
    %1385 = vmatpush1.msra.mxu0 0.0
    %1386 = vmatprep.subr.mxu0 0.0
    %1387 = vmatpush1.msra.mxu0 0.0
    %1388 = vmatprep.subr.mxu0 0.0
    %1389 = vmatpush1.msra.mxu0 0.0
    %1390 = vmatprep.subr.mxu0 0.0
    %1391 = vmatpush1.msra.mxu0 0.0
    %1392 = vmatprep.subr.mxu0 0.0
    %1393 = vmatpush1.msra.mxu0 0.0
    %1394 = vmatprep.subr.mxu0 0.0
    %1395 = vmatpush1.msra.mxu0 0.0
    %1396 = vmatprep.subr.mxu0 0.0
    %1397 = vmatpush1.msra.mxu0 0.0
    %1398 = vmatprep.mubr.f32.mxu0 0.0
    %1399 = vmatmul.mubr.f32.gmra.mrb[0].mxu0 %v1329
    %v1400 = vpop.f32.mrb[0].mxu0
    %v1401 = vadd.f32 0.0, %v1400
    %v1402 = vpop.f32.mrb[0].mxu0
    %1403 = vmatprep.mubr.f32.mxu0 0.0
    %1404 = vmatmul.mubr.f32.gmra.mrb[0].mxu0 %v1332
    %v1405 = vpop.f32.mrb[0].mxu0
    %v1406 = vadd.f32 0.0, %v1405
    %v1407 = vpop.f32.mrb[0].mxu0
    %1408 = vdwg.mxu0
    %v1409 = vadd.f32 %v990, %v1401
    %v1410 = vadd.f32 %v995, %v1406
    %1411 = vrot.lane.b32.xlu0 %v163, 104
    %v1412 = vpop.permute.xlu0 %1411
    %1413 = vrot.lane.b32.xlu0 %v163, 72
    %v1414 = vpop.permute.xlu0 %1413
    %v1415 = vsel %vm180, %v1412, 0
    %v1417 = vsel %vm180, %v1414, 0
    %1419 = vmatprep.subr.mxu0 0.0
    %1420 = vmatpush1.xpose.msra.mxu0 %v1417
    %1421 = vmatprep.subr.mxu0 0.0
    %1422 = vmatpush1.xpose.msra.mxu0 0.0
    %1423 = vmatprep.subr.mxu0 0.0
    %1424 = vmatpush1.xpose.msra.mxu0 0.0
    %1425 = vmatprep.subr.mxu0 0.0
    %1426 = vmatpush1.xpose.msra.mxu0 0.0
    %1427 = vmatprep.subr.mxu0 0.0
    %1428 = vmatpush1.xpose.msra.mxu0 0.0
    %1429 = vmatprep.subr.mxu0 0.0
    %1430 = vmatpush1.xpose.msra.mxu0 0.0
    %1431 = vmatprep.subr.mxu0 0.0
    %1432 = vmatpush1.xpose.msra.mxu0 0.0
    %1433 = vmatprep.subr.mxu0 0.0
    %1434 = vmatpush1.xpose.msra.mxu0 0.0
    %1435 = vmatprep.subr.mxu0 0.0
    %1436 = vmatpush1.xpose.msra.mxu0 0.0
    %1437 = vmatprep.subr.mxu0 0.0
    %1438 = vmatpush1.xpose.msra.mxu0 0.0
    %1439 = vmatprep.subr.mxu0 0.0
    %1440 = vmatpush1.xpose.msra.mxu0 0.0
    %1441 = vmatprep.subr.mxu0 0.0
    %1442 = vmatpush1.xpose.msra.mxu0 0.0
    %1443 = vmatprep.subr.mxu0 0.0
    %1444 = vmatpush1.xpose.msra.mxu0 0.0
    %1445 = vmatprep.subr.mxu0 0.0
    %1446 = vmatpush1.xpose.msra.mxu0 0.0
    %1447 = vmatprep.subr.mxu0 0.0
    %1448 = vmatpush1.xpose.msra.mxu0 0.0
    %1449 = vmatprep.subr.mxu0 0.0
    %1450 = vmatpush1.xpose.msra.mxu0 0.0
    %1451 = vmatprep.subr.mxu0 0.0
    %1452 = vmatpush1.xpose.msra.mxu0 0.0
    %1453 = vmatprep.subr.mxu0 0.0
    %1454 = vmatpush1.xpose.msra.mxu0 0.0
    %1455 = vmatprep.subr.mxu0 0.0
    %1456 = vmatpush1.xpose.msra.mxu0 0.0
    %1457 = vmatprep.subr.mxu0 0.0
    %1458 = vmatpush1.xpose.msra.mxu0 0.0
    %1459 = vmatprep.subr.mxu0 0.0
    %1460 = vmatpush1.xpose.msra.mxu0 0.0
    %1461 = vmatprep.subr.mxu0 0.0
    %1462 = vmatpush1.xpose.msra.mxu0 0.0
    %1463 = vmatprep.subr.mxu0 0.0
    %1464 = vmatpush1.xpose.msra.mxu0 0.0
    %1465 = vmatprep.subr.mxu0 0.0
    %1466 = vmatpush1.xpose.msra.mxu0 0.0
    %1467 = vmatprep.subr.mxu0 0.0
    %1468 = vmatpush1.xpose.msra.mxu0 0.0
    %1469 = vmatprep.subr.mxu0 0.0
    %1470 = vmatpush1.xpose.msra.mxu0 0.0
    %1471 = vmatprep.subr.mxu0 0.0
    %1472 = vmatpush1.xpose.msra.mxu0 0.0
    %1473 = vmatprep.subr.mxu0 0.0
    %1474 = vmatpush1.xpose.msra.mxu0 0.0
    %1475 = vmatprep.subr.mxu0 0.0
    %1476 = vmatpush1.xpose.msra.mxu0 0.0
    %1477 = vmatprep.subr.mxu0 0.0
    %1478 = vmatpush1.xpose.msra.mxu0 0.0
    %1479 = vmatprep.subr.mxu0 0.0
    %1480 = vmatpush1.xpose.msra.mxu0 0.0
    %1481 = vmatprep.subr.mxu0 0.0
    %1482 = vmatpush1.xpose.msra.mxu0 0.0
    %1483 = vmatprep.mubr.f32.mxu0 0.0
    %1484 = vmatmul.mubr.f32.gmra.mrb[0].mxu0 %v1415
    %v1485 = vpop.f32.mrb[0].mxu0
    %v1486 = vadd.f32 %v171, %v1485
    %v1487 = vpop.f32.mrb[0].mxu0
    %1488 = vdwg.mxu0
    %1489 = vrot.lane.b32.xlu0 %v168, 104
    %v1490 = vpop.permute.xlu0 %1489
    %1491 = vrot.lane.b32.xlu0 %v168, 72
    %v1492 = vpop.permute.xlu0 %1491
    %v1493 = vsel %vm180, %v1490, 0
    %v1495 = vsel %vm180, %v1492, 0
    %1497 = vmatprep.subr.mxu0 0.0
    %1498 = vmatpush1.xpose.msra.mxu0 %v1495
    %1499 = vmatprep.subr.mxu0 0.0
    %1500 = vmatpush1.xpose.msra.mxu0 0.0
    %1501 = vmatprep.subr.mxu0 0.0
    %1502 = vmatpush1.xpose.msra.mxu0 0.0
    %1503 = vmatprep.subr.mxu0 0.0
    %1504 = vmatpush1.xpose.msra.mxu0 0.0
    %1505 = vmatprep.subr.mxu0 0.0
    %1506 = vmatpush1.xpose.msra.mxu0 0.0
    %1507 = vmatprep.subr.mxu0 0.0
    %1508 = vmatpush1.xpose.msra.mxu0 0.0
    %1509 = vmatprep.subr.mxu0 0.0
    %1510 = vmatpush1.xpose.msra.mxu0 0.0
    %1511 = vmatprep.subr.mxu0 0.0
    %1512 = vmatpush1.xpose.msra.mxu0 0.0
    %1513 = vmatprep.subr.mxu0 0.0
    %1514 = vmatpush1.xpose.msra.mxu0 0.0
    %1515 = vmatprep.subr.mxu0 0.0
    %1516 = vmatpush1.xpose.msra.mxu0 0.0
    %1517 = vmatprep.subr.mxu0 0.0
    %1518 = vmatpush1.xpose.msra.mxu0 0.0
    %1519 = vmatprep.subr.mxu0 0.0
    %1520 = vmatpush1.xpose.msra.mxu0 0.0
    %1521 = vmatprep.subr.mxu0 0.0
    %1522 = vmatpush1.xpose.msra.mxu0 0.0
    %1523 = vmatprep.subr.mxu0 0.0
    %1524 = vmatpush1.xpose.msra.mxu0 0.0
    %1525 = vmatprep.subr.mxu0 0.0
    %1526 = vmatpush1.xpose.msra.mxu0 0.0
    %1527 = vmatprep.subr.mxu0 0.0
    %1528 = vmatpush1.xpose.msra.mxu0 0.0
    %1529 = vmatprep.subr.mxu0 0.0
    %1530 = vmatpush1.xpose.msra.mxu0 0.0
    %1531 = vmatprep.subr.mxu0 0.0
    %1532 = vmatpush1.xpose.msra.mxu0 0.0
    %1533 = vmatprep.subr.mxu0 0.0
    %1534 = vmatpush1.xpose.msra.mxu0 0.0
    %1535 = vmatprep.subr.mxu0 0.0
    %1536 = vmatpush1.xpose.msra.mxu0 0.0
    %1537 = vmatprep.subr.mxu0 0.0
    %1538 = vmatpush1.xpose.msra.mxu0 0.0
    %1539 = vmatprep.subr.mxu0 0.0
    %1540 = vmatpush1.xpose.msra.mxu0 0.0
    %1541 = vmatprep.subr.mxu0 0.0
    %1542 = vmatpush1.xpose.msra.mxu0 0.0
    %1543 = vmatprep.subr.mxu0 0.0
    %1544 = vmatpush1.xpose.msra.mxu0 0.0
    %1545 = vmatprep.subr.mxu0 0.0
    %1546 = vmatpush1.xpose.msra.mxu0 0.0
    %1547 = vmatprep.subr.mxu0 0.0
    %1548 = vmatpush1.xpose.msra.mxu0 0.0
    %1549 = vmatprep.subr.mxu0 0.0
    %1550 = vmatpush1.xpose.msra.mxu0 0.0
    %1551 = vmatprep.subr.mxu0 0.0
    %1552 = vmatpush1.xpose.msra.mxu0 0.0
    %1553 = vmatprep.subr.mxu0 0.0
    %1554 = vmatpush1.xpose.msra.mxu0 0.0
    %1555 = vmatprep.subr.mxu0 0.0
    %1556 = vmatpush1.xpose.msra.mxu0 0.0
    %1557 = vmatprep.subr.mxu0 0.0
    %1558 = vmatpush1.xpose.msra.mxu0 0.0
    %1559 = vmatprep.subr.mxu0 0.0
    %1560 = vmatpush1.xpose.msra.mxu0 0.0
    %1561 = vmatprep.mubr.f32.mxu0 0.0
    %1562 = vmatmul.mubr.f32.gmra.mrb[0].mxu0 %v1493
    %v1563 = vpop.f32.mrb[0].mxu0
    %v1564 = vadd.f32 %v172, %v1563
    %v1565 = vpop.f32.mrb[0].mxu0
    %1566 = vdwg.mxu0
    %v1567 = vsel %vm180, %v1486, -inf
    %1568 = vmax.xlane.f32.xlu0 %v1567
    %v1569 = vpop.xlane.xlu0 %1568
    %v1570 = vsel %vm180, %v1564, -inf
    %1571 = vmax.xlane.f32.xlu0 %v1570
    %v1572 = vpop.xlane.xlu0 %1571
    %v1573 = vsub.f32 %v1486, %v1569
    %v1574 = vsub.f32 %v1564, %v1572
    %v1575 = vmul.f32 %v1573, 1.442695
    %v1576 = vpow.pop %v1575
    %v1577 = vmul.f32 %v1574, 1.442695
    %v1578 = vpow.pop %v1577
    %v1579 = vsel %vm180, %v1576, 0.0
    %1580 = vadd.xlane.f32.xlu0 %v1579
    %v1581 = vpop.xlane.xlu0 %1580
    %v1582 = vsel %vm180, %v1578, 0.0
    %1583 = vadd.xlane.f32.xlu0 %v1582
    %v1584 = vpop.xlane.xlu0 %1583
    %v1585 = vrcp.pop %v1581
    %v1586 = vrcp.pop %v1584
    %v1587 = vmul.f32 %v1576, %v1585
    %v1588 = vmul.f32 %v1578, %v1586
    %1589 = vrot.lane.b32.xlu0 %v163, 40
    %v1590 = vpop.permute.xlu0 %1589
    %v1593 = vsel %vm180, %v1587, 0
    %1595 = vmatprep.subr.mxu0 0.0
    %1596 = vmatpush1.msra.mxu0 %v1590
    %1597 = vmatprep.subr.mxu0 0.0
    %1598 = vmatpush1.msra.mxu0 0.0
    %1599 = vmatprep.subr.mxu0 0.0
    %1600 = vmatpush1.msra.mxu0 0.0
    %1601 = vmatprep.subr.mxu0 0.0
    %1602 = vmatpush1.msra.mxu0 0.0
    %1603 = vmatprep.subr.mxu0 0.0
    %1604 = vmatpush1.msra.mxu0 0.0
    %1605 = vmatprep.subr.mxu0 0.0
    %1606 = vmatpush1.msra.mxu0 0.0
    %1607 = vmatprep.subr.mxu0 0.0
    %1608 = vmatpush1.msra.mxu0 0.0
    %1609 = vmatprep.subr.mxu0 0.0
    %1610 = vmatpush1.msra.mxu0 0.0
    %1611 = vmatprep.subr.mxu0 0.0
    %1612 = vmatpush1.msra.mxu0 0.0
    %1613 = vmatprep.subr.mxu0 0.0
    %1614 = vmatpush1.msra.mxu0 0.0
    %1615 = vmatprep.subr.mxu0 0.0
    %1616 = vmatpush1.msra.mxu0 0.0
    %1617 = vmatprep.subr.mxu0 0.0
    %1618 = vmatpush1.msra.mxu0 0.0
    %1619 = vmatprep.subr.mxu0 0.0
    %1620 = vmatpush1.msra.mxu0 0.0
    %1621 = vmatprep.subr.mxu0 0.0
    %1622 = vmatpush1.msra.mxu0 0.0
    %1623 = vmatprep.subr.mxu0 0.0
    %1624 = vmatpush1.msra.mxu0 0.0
    %1625 = vmatprep.subr.mxu0 0.0
    %1626 = vmatpush1.msra.mxu0 0.0
    %1627 = vmatprep.subr.mxu0 0.0
    %1628 = vmatpush1.msra.mxu0 0.0
    %1629 = vmatprep.subr.mxu0 0.0
    %1630 = vmatpush1.msra.mxu0 0.0
    %1631 = vmatprep.subr.mxu0 0.0
    %1632 = vmatpush1.msra.mxu0 0.0
    %1633 = vmatprep.subr.mxu0 0.0
    %1634 = vmatpush1.msra.mxu0 0.0
    %1635 = vmatprep.subr.mxu0 0.0
    %1636 = vmatpush1.msra.mxu0 0.0
    %1637 = vmatprep.subr.mxu0 0.0
    %1638 = vmatpush1.msra.mxu0 0.0
    %1639 = vmatprep.subr.mxu0 0.0
    %1640 = vmatpush1.msra.mxu0 0.0
    %1641 = vmatprep.subr.mxu0 0.0
    %1642 = vmatpush1.msra.mxu0 0.0
    %1643 = vmatprep.subr.mxu0 0.0
    %1644 = vmatpush1.msra.mxu0 0.0
    %1645 = vmatprep.subr.mxu0 0.0
    %1646 = vmatpush1.msra.mxu0 0.0
    %1647 = vmatprep.subr.mxu0 0.0
    %1648 = vmatpush1.msra.mxu0 0.0
    %1649 = vmatprep.subr.mxu0 0.0
    %1650 = vmatpush1.msra.mxu0 0.0
    %1651 = vmatprep.subr.mxu0 0.0
    %1652 = vmatpush1.msra.mxu0 0.0
    %1653 = vmatprep.subr.mxu0 0.0
    %1654 = vmatpush1.msra.mxu0 0.0
    %1655 = vmatprep.subr.mxu0 0.0
    %1656 = vmatpush1.msra.mxu0 0.0
    %1657 = vmatprep.subr.mxu0 0.0
    %1658 = vmatpush1.msra.mxu0 0.0
    %1659 = vmatprep.mubr.f32.mxu0 0.0
    %1660 = vmatmul.mubr.f32.gmra.mrb[0].mxu0 %v1593
    %v1661 = vpop.f32.mrb[0].mxu0
    %v1662 = vadd.f32 0.0, %v1661
    %v1663 = vpop.f32.mrb[0].mxu0
    %1664 = vdwg.mxu0
    %1665 = vrot.lane.b32.xlu0 %v168, 40
    %v1666 = vpop.permute.xlu0 %1665
    %v1669 = vsel %vm180, %v1588, 0
    %1671 = vmatprep.subr.mxu0 0.0
    %1672 = vmatpush1.msra.mxu0 %v1666
    %1673 = vmatprep.subr.mxu0 0.0
    %1674 = vmatpush1.msra.mxu0 0.0
    %1675 = vmatprep.subr.mxu0 0.0
    %1676 = vmatpush1.msra.mxu0 0.0
    %1677 = vmatprep.subr.mxu0 0.0
    %1678 = vmatpush1.msra.mxu0 0.0
    %1679 = vmatprep.subr.mxu0 0.0
    %1680 = vmatpush1.msra.mxu0 0.0
    %1681 = vmatprep.subr.mxu0 0.0
    %1682 = vmatpush1.msra.mxu0 0.0
    %1683 = vmatprep.subr.mxu0 0.0
    %1684 = vmatpush1.msra.mxu0 0.0
    %1685 = vmatprep.subr.mxu0 0.0
    %1686 = vmatpush1.msra.mxu0 0.0
    %1687 = vmatprep.subr.mxu0 0.0
    %1688 = vmatpush1.msra.mxu0 0.0
    %1689 = vmatprep.subr.mxu0 0.0
    %1690 = vmatpush1.msra.mxu0 0.0
    %1691 = vmatprep.subr.mxu0 0.0
    %1692 = vmatpush1.msra.mxu0 0.0
    %1693 = vmatprep.subr.mxu0 0.0
    %1694 = vmatpush1.msra.mxu0 0.0
    %1695 = vmatprep.subr.mxu0 0.0
    %1696 = vmatpush1.msra.mxu0 0.0
    %1697 = vmatprep.subr.mxu0 0.0
    %1698 = vmatpush1.msra.mxu0 0.0
    %1699 = vmatprep.subr.mxu0 0.0
    %1700 = vmatpush1.msra.mxu0 0.0
    %1701 = vmatprep.subr.mxu0 0.0
    %1702 = vmatpush1.msra.mxu0 0.0
    %1703 = vmatprep.subr.mxu0 0.0
    %1704 = vmatpush1.msra.mxu0 0.0
    %1705 = vmatprep.subr.mxu0 0.0
    %1706 = vmatpush1.msra.mxu0 0.0
    %1707 = vmatprep.subr.mxu0 0.0
    %1708 = vmatpush1.msra.mxu0 0.0
    %1709 = vmatprep.subr.mxu0 0.0
    %1710 = vmatpush1.msra.mxu0 0.0
    %1711 = vmatprep.subr.mxu0 0.0
    %1712 = vmatpush1.msra.mxu0 0.0
    %1713 = vmatprep.subr.mxu0 0.0
    %1714 = vmatpush1.msra.mxu0 0.0
    %1715 = vmatprep.subr.mxu0 0.0
    %1716 = vmatpush1.msra.mxu0 0.0
    %1717 = vmatprep.subr.mxu0 0.0
    %1718 = vmatpush1.msra.mxu0 0.0
    %1719 = vmatprep.subr.mxu0 0.0
    %1720 = vmatpush1.msra.mxu0 0.0
    %1721 = vmatprep.subr.mxu0 0.0
    %1722 = vmatpush1.msra.mxu0 0.0
    %1723 = vmatprep.subr.mxu0 0.0
    %1724 = vmatpush1.msra.mxu0 0.0
    %1725 = vmatprep.subr.mxu0 0.0
    %1726 = vmatpush1.msra.mxu0 0.0
    %1727 = vmatprep.subr.mxu0 0.0
    %1728 = vmatpush1.msra.mxu0 0.0
    %1729 = vmatprep.subr.mxu0 0.0
    %1730 = vmatpush1.msra.mxu0 0.0
    %1731 = vmatprep.subr.mxu0 0.0
    %1732 = vmatpush1.msra.mxu0 0.0
    %1733 = vmatprep.subr.mxu0 0.0
    %1734 = vmatpush1.msra.mxu0 0.0
    %1735 = vmatprep.mubr.f32.mxu0 0.0
    %1736 = vmatmul.mubr.f32.gmra.mrb[0].mxu0 %v1669
    %v1737 = vpop.f32.mrb[0].mxu0
    %v1738 = vadd.f32 0.0, %v1737
    %v1739 = vpop.f32.mrb[0].mxu0
    %1740 = vdwg.mxu0
    %v1742 = vsel %vm180, %v1662, 0
    %v1745 = vsel %vm180, %v1738, 0
    %1747 = vmatprep.subr.mxu0 0.0
    %1748 = vmatpush1.msra.mxu0 %v176
    %1749 = vmatprep.subr.mxu0 0.0
    %1750 = vmatpush1.msra.mxu0 0.0
    %1751 = vmatprep.subr.mxu0 0.0
    %1752 = vmatpush1.msra.mxu0 0.0
    %1753 = vmatprep.subr.mxu0 0.0
    %1754 = vmatpush1.msra.mxu0 0.0
    %1755 = vmatprep.subr.mxu0 0.0
    %1756 = vmatpush1.msra.mxu0 0.0
    %1757 = vmatprep.subr.mxu0 0.0
    %1758 = vmatpush1.msra.mxu0 0.0
    %1759 = vmatprep.subr.mxu0 0.0
    %1760 = vmatpush1.msra.mxu0 0.0
    %1761 = vmatprep.subr.mxu0 0.0
    %1762 = vmatpush1.msra.mxu0 0.0
    %1763 = vmatprep.subr.mxu0 0.0
    %1764 = vmatpush1.msra.mxu0 0.0
    %1765 = vmatprep.subr.mxu0 0.0
    %1766 = vmatpush1.msra.mxu0 0.0
    %1767 = vmatprep.subr.mxu0 0.0
    %1768 = vmatpush1.msra.mxu0 0.0
    %1769 = vmatprep.subr.mxu0 0.0
    %1770 = vmatpush1.msra.mxu0 0.0
    %1771 = vmatprep.subr.mxu0 0.0
    %1772 = vmatpush1.msra.mxu0 0.0
    %1773 = vmatprep.subr.mxu0 0.0
    %1774 = vmatpush1.msra.mxu0 0.0
    %1775 = vmatprep.subr.mxu0 0.0
    %1776 = vmatpush1.msra.mxu0 0.0
    %1777 = vmatprep.subr.mxu0 0.0
    %1778 = vmatpush1.msra.mxu0 0.0
    %1779 = vmatprep.subr.mxu0 0.0
    %1780 = vmatpush1.msra.mxu0 0.0
    %1781 = vmatprep.subr.mxu0 0.0
    %1782 = vmatpush1.msra.mxu0 0.0
    %1783 = vmatprep.subr.mxu0 0.0
    %1784 = vmatpush1.msra.mxu0 0.0
    %1785 = vmatprep.subr.mxu0 0.0
    %1786 = vmatpush1.msra.mxu0 0.0
    %1787 = vmatprep.subr.mxu0 0.0
    %1788 = vmatpush1.msra.mxu0 0.0
    %1789 = vmatprep.subr.mxu0 0.0
    %1790 = vmatpush1.msra.mxu0 0.0
    %1791 = vmatprep.subr.mxu0 0.0
    %1792 = vmatpush1.msra.mxu0 0.0
    %1793 = vmatprep.subr.mxu0 0.0
    %1794 = vmatpush1.msra.mxu0 0.0
    %1795 = vmatprep.subr.mxu0 0.0
    %1796 = vmatpush1.msra.mxu0 0.0
    %1797 = vmatprep.subr.mxu0 0.0
    %1798 = vmatpush1.msra.mxu0 0.0
    %1799 = vmatprep.subr.mxu0 0.0
    %1800 = vmatpush1.msra.mxu0 0.0
    %1801 = vmatprep.subr.mxu0 0.0
    %1802 = vmatpush1.msra.mxu0 0.0
    %1803 = vmatprep.subr.mxu0 0.0
    %1804 = vmatpush1.msra.mxu0 0.0
    %1805 = vmatprep.subr.mxu0 0.0
    %1806 = vmatpush1.msra.mxu0 0.0
    %1807 = vmatprep.subr.mxu0 0.0
    %1808 = vmatpush1.msra.mxu0 0.0
    %1809 = vmatprep.subr.mxu0 0.0
    %1810 = vmatpush1.msra.mxu0 0.0
    %1811 = vmatprep.mubr.f32.mxu0 0.0
    %1812 = vmatmul.mubr.f32.gmra.mrb[0].mxu0 %v1742
    %v1813 = vpop.f32.mrb[0].mxu0
    %v1814 = vadd.f32 0.0, %v1813
    %v1815 = vpop.f32.mrb[0].mxu0
    %1816 = vmatprep.mubr.f32.mxu0 0.0
    %1817 = vmatmul.mubr.f32.gmra.mrb[0].mxu0 %v1745
    %v1818 = vpop.f32.mrb[0].mxu0
    %v1819 = vadd.f32 0.0, %v1818
    %v1820 = vpop.f32.mrb[0].mxu0
    %1821 = vdwg.mxu0
    %v1822 = vadd.f32 %v1409, %v1814
    %v1823 = vadd.f32 %v1410, %v1819
    %v1824 = vadd.f32 %v76, %v1822
    %v1825 = vadd.f32 %v77, %v1823
    %v1826 = vld [vmem:[%s5] sm:$0x1]
    %v1828 = vlaneseq
    %v1829 = vshrl.u32 %v1828, 7
    %v1830 = vsub.s32 0, %v1829
    %v1831 = vrot.slane %v1826, %v1830
    %v1833 = vadd.f32 %v1824, %v1831
    %v1834 = vadd.f32 %v1825, %v1831
    %v1835 = vld [vmem:[%s6] sm:$0x1]
    %v1836 = vld [vmem:[%s7] sm:$0x1]
    %v1837 = vsel %vm89, %v1833, 0.0
    %1838 = vadd.xlane.f32.xlu0 %v1837
    %v1839 = vpop.xlane.xlu0 %1838
    %v1840 = vsel %vm89, %v1834, 0.0
    %1841 = vadd.xlane.f32.xlu0 %v1840
    %v1842 = vpop.xlane.xlu0 %1841
    %v1843 = vrcp.pop 32.0
    %v1844 = vmul.f32 %v1839, %v1843
    %v1845 = vmul.f32 %v1842, %v1843
    %v1846 = vsub.f32 %v1833, %v1844
    %v1847 = vsub.f32 %v1834, %v1845
    %v1848 = vmul.f32 %v1846, %v1846
    %v1849 = vmul.f32 %v1847, %v1847
    %v1850 = vsel %vm89, %v1848, 0.0
    %1851 = vadd.xlane.f32.xlu0 %v1850
    %v1852 = vpop.xlane.xlu0 %1851
    %v1853 = vsel %vm89, %v1849, 0.0
    %1854 = vadd.xlane.f32.xlu0 %v1853
    %v1855 = vpop.xlane.xlu0 %1854
    %v1856 = vmul.f32 %v1852, %v1843
    %v1857 = vmul.f32 %v1855, %v1843
    %v1858 = vadd.f32 %v1856, 1e-05
    %v1859 = vadd.f32 %v1857, 1e-05
    %v1860 = vrsqrt.pop %v1858
    %v1861 = vrsqrt.pop %v1859
    %v1862 = vmul.f32 %v1846, %v1860
    %v1863 = vmul.f32 %v1847, %v1861
    %v1865 = vlaneseq
    %v1866 = vshrl.u32 %v1865, 7
    %v1867 = vsub.s32 0, %v1866
    %v1868 = vrot.slane %v1835, %v1867
    %v1870 = vmul.f32 %v1862, %v1868
    %v1871 = vmul.f32 %v1863, %v1868
    %v1873 = vlaneseq
    %v1874 = vshrl.u32 %v1873, 7
    %v1875 = vsub.s32 0, %v1874
    %v1876 = vrot.slane %v1836, %v1875
    %v1878 = vadd.f32 %v1870, %v1876
    %v1879 = vadd.f32 %v1871, %v1876
    %v1880 = vld [vmem:[%s8] sm:$0xff]
    %v1881 = vld [vmem:[%s8 + $0x8] sm:$0xff]
    %v1882 = vld [vmem:[%s8 + $0x10] sm:$0xff]
    %v1883 = vld [vmem:[%s8 + $0x18] sm:$0xff]
    %v1884 = vld [vmem:[%s9] sm:$0x1]
    %v1886 = vlaneseq
    %v1887 = vshrl.u32 %v1886, 7
    %v1888 = vsub.s32 0, %v1887
    %v1889 = vrot.slane %v1884, %v1888
    %v1892 = vsel %vm89, %v1878, 0
    %v1895 = vsel %vm89, %v1879, 0
    %1897 = vmatprep.subr.mxu0 0.0
    %1898 = vmatpush1.msra.mxu0 %v1880
    %1899 = vmatprep.subr.mxu0 0.0
    %1900 = vmatpush1.msra.mxu0 %v1881
    %1901 = vmatprep.subr.mxu0 0.0
    %1902 = vmatpush1.msra.mxu0 %v1882
    %1903 = vmatprep.subr.mxu0 0.0
    %1904 = vmatpush1.msra.mxu0 %v1883
    %1905 = vmatprep.subr.mxu0 0.0
    %1906 = vmatpush1.msra.mxu0 0.0
    %1907 = vmatprep.subr.mxu0 0.0
    %1908 = vmatpush1.msra.mxu0 0.0
    %1909 = vmatprep.subr.mxu0 0.0
    %1910 = vmatpush1.msra.mxu0 0.0
    %1911 = vmatprep.subr.mxu0 0.0
    %1912 = vmatpush1.msra.mxu0 0.0
    %1913 = vmatprep.subr.mxu0 0.0
    %1914 = vmatpush1.msra.mxu0 0.0
    %1915 = vmatprep.subr.mxu0 0.0
    %1916 = vmatpush1.msra.mxu0 0.0
    %1917 = vmatprep.subr.mxu0 0.0
    %1918 = vmatpush1.msra.mxu0 0.0
    %1919 = vmatprep.subr.mxu0 0.0
    %1920 = vmatpush1.msra.mxu0 0.0
    %1921 = vmatprep.subr.mxu0 0.0
    %1922 = vmatpush1.msra.mxu0 0.0
    %1923 = vmatprep.subr.mxu0 0.0
    %1924 = vmatpush1.msra.mxu0 0.0
    %1925 = vmatprep.subr.mxu0 0.0
    %1926 = vmatpush1.msra.mxu0 0.0
    %1927 = vmatprep.subr.mxu0 0.0
    %1928 = vmatpush1.msra.mxu0 0.0
    %1929 = vmatprep.subr.mxu0 0.0
    %1930 = vmatpush1.msra.mxu0 0.0
    %1931 = vmatprep.subr.mxu0 0.0
    %1932 = vmatpush1.msra.mxu0 0.0
    %1933 = vmatprep.subr.mxu0 0.0
    %1934 = vmatpush1.msra.mxu0 0.0
    %1935 = vmatprep.subr.mxu0 0.0
    %1936 = vmatpush1.msra.mxu0 0.0
    %1937 = vmatprep.subr.mxu0 0.0
    %1938 = vmatpush1.msra.mxu0 0.0
    %1939 = vmatprep.subr.mxu0 0.0
    %1940 = vmatpush1.msra.mxu0 0.0
    %1941 = vmatprep.subr.mxu0 0.0
    %1942 = vmatpush1.msra.mxu0 0.0
    %1943 = vmatprep.subr.mxu0 0.0
    %1944 = vmatpush1.msra.mxu0 0.0
    %1945 = vmatprep.subr.mxu0 0.0
    %1946 = vmatpush1.msra.mxu0 0.0
    %1947 = vmatprep.subr.mxu0 0.0
    %1948 = vmatpush1.msra.mxu0 0.0
    %1949 = vmatprep.subr.mxu0 0.0
    %1950 = vmatpush1.msra.mxu0 0.0
    %1951 = vmatprep.subr.mxu0 0.0
    %1952 = vmatpush1.msra.mxu0 0.0
    %1953 = vmatprep.subr.mxu0 0.0
    %1954 = vmatpush1.msra.mxu0 0.0
    %1955 = vmatprep.subr.mxu0 0.0
    %1956 = vmatpush1.msra.mxu0 0.0
    %1957 = vmatprep.subr.mxu0 0.0
    %1958 = vmatpush1.msra.mxu0 0.0
    %1959 = vmatprep.subr.mxu0 0.0
    %1960 = vmatpush1.msra.mxu0 0.0
    %1961 = vmatprep.mubr.f32.mxu0 0.0
    %1962 = vmatmul.mubr.f32.gmra.mrb[0].mxu0 %v1892
    %v1963 = vpop.f32.mrb[0].mxu0
    %v1964 = vadd.f32 %v1889, %v1963
    %v1965 = vpop.f32.mrb[0].mxu0
    %1966 = vmatprep.mubr.f32.mxu0 0.0
    %1967 = vmatmul.mubr.f32.gmra.mrb[0].mxu0 %v1895
    %v1968 = vpop.f32.mrb[0].mxu0
    %v1969 = vadd.f32 %v1889, %v1968
    %v1970 = vpop.f32.mrb[0].mxu0
    %1971 = vdwg.mxu0
    %v1972 = vmax.f32 %v1964, 0.0
    %v1973 = vmax.f32 %v1969, 0.0
    %v1974 = vld [vmem:[%s10] sm:$0xff]
    %v1975 = vld [vmem:[%s10 + $0x8] sm:$0xff]
    %v1976 = vld [vmem:[%s10 + $0x10] sm:$0xff]
    %v1977 = vld [vmem:[%s10 + $0x18] sm:$0xff]
    %v1978 = vld [vmem:[%s10 + $0x20] sm:$0xff]
    %v1979 = vld [vmem:[%s10 + $0x28] sm:$0xff]
    %v1980 = vld [vmem:[%s10 + $0x30] sm:$0xff]
    %v1981 = vld [vmem:[%s10 + $0x38] sm:$0xff]
    %v1982 = vld [vmem:[%s11] sm:$0x1]
    %v1984 = vlaneseq
    %v1985 = vshrl.u32 %v1984, 7
    %v1986 = vsub.s32 0, %v1985
    %v1987 = vrot.slane %v1982, %v1986
    %vm1989 = vcmask 523264
    %v1991 = vsel %vm1989, %v1972, 0
    %v1994 = vsel %vm1989, %v1973, 0
    %1996 = vmatprep.subr.mxu0 0.0
    %1997 = vmatpush1.msra.mxu0 %v1974
    %1998 = vmatprep.subr.mxu0 0.0
    %1999 = vmatpush1.msra.mxu0 %v1975
    %2000 = vmatprep.subr.mxu0 0.0
    %2001 = vmatpush1.msra.mxu0 %v1976
    %2002 = vmatprep.subr.mxu0 0.0
    %2003 = vmatpush1.msra.mxu0 %v1977
    %2004 = vmatprep.subr.mxu0 0.0
    %2005 = vmatpush1.msra.mxu0 %v1978
    %2006 = vmatprep.subr.mxu0 0.0
    %2007 = vmatpush1.msra.mxu0 %v1979
    %2008 = vmatprep.subr.mxu0 0.0
    %2009 = vmatpush1.msra.mxu0 %v1980
    %2010 = vmatprep.subr.mxu0 0.0
    %2011 = vmatpush1.msra.mxu0 %v1981
    %2012 = vmatprep.subr.mxu0 0.0
    %2013 = vmatpush1.msra.mxu0 0.0
    %2014 = vmatprep.subr.mxu0 0.0
    %2015 = vmatpush1.msra.mxu0 0.0
    %2016 = vmatprep.subr.mxu0 0.0
    %2017 = vmatpush1.msra.mxu0 0.0
    %2018 = vmatprep.subr.mxu0 0.0
    %2019 = vmatpush1.msra.mxu0 0.0
    %2020 = vmatprep.subr.mxu0 0.0
    %2021 = vmatpush1.msra.mxu0 0.0
    %2022 = vmatprep.subr.mxu0 0.0
    %2023 = vmatpush1.msra.mxu0 0.0
    %2024 = vmatprep.subr.mxu0 0.0
    %2025 = vmatpush1.msra.mxu0 0.0
    %2026 = vmatprep.subr.mxu0 0.0
    %2027 = vmatpush1.msra.mxu0 0.0
    %2028 = vmatprep.subr.mxu0 0.0
    %2029 = vmatpush1.msra.mxu0 0.0
    %2030 = vmatprep.subr.mxu0 0.0
    %2031 = vmatpush1.msra.mxu0 0.0
    %2032 = vmatprep.subr.mxu0 0.0
    %2033 = vmatpush1.msra.mxu0 0.0
    %2034 = vmatprep.subr.mxu0 0.0
    %2035 = vmatpush1.msra.mxu0 0.0
    %2036 = vmatprep.subr.mxu0 0.0
    %2037 = vmatpush1.msra.mxu0 0.0
    %2038 = vmatprep.subr.mxu0 0.0
    %2039 = vmatpush1.msra.mxu0 0.0
    %2040 = vmatprep.subr.mxu0 0.0
    %2041 = vmatpush1.msra.mxu0 0.0
    %2042 = vmatprep.subr.mxu0 0.0
    %2043 = vmatpush1.msra.mxu0 0.0
    %2044 = vmatprep.subr.mxu0 0.0
    %2045 = vmatpush1.msra.mxu0 0.0
    %2046 = vmatprep.subr.mxu0 0.0
    %2047 = vmatpush1.msra.mxu0 0.0
    %2048 = vmatprep.subr.mxu0 0.0
    %2049 = vmatpush1.msra.mxu0 0.0
    %2050 = vmatprep.subr.mxu0 0.0
    %2051 = vmatpush1.msra.mxu0 0.0
    %2052 = vmatprep.subr.mxu0 0.0
    %2053 = vmatpush1.msra.mxu0 0.0
    %2054 = vmatprep.subr.mxu0 0.0
    %2055 = vmatpush1.msra.mxu0 0.0
    %2056 = vmatprep.subr.mxu0 0.0
    %2057 = vmatpush1.msra.mxu0 0.0
    %2058 = vmatprep.subr.mxu0 0.0
    %2059 = vmatpush1.msra.mxu0 0.0
    %2060 = vmatprep.mubr.f32.mxu0 0.0
    %2061 = vmatmul.mubr.f32.gmra.mrb[0].mxu0 %v1991
    %v2062 = vpop.f32.mrb[0].mxu0
    %v2063 = vadd.f32 %v1987, %v2062
    %v2064 = vpop.f32.mrb[0].mxu0
    %2065 = vmatprep.mubr.f32.mxu0 0.0
    %2066 = vmatmul.mubr.f32.gmra.mrb[0].mxu0 %v1994
    %v2067 = vpop.f32.mrb[0].mxu0
    %v2068 = vadd.f32 %v1987, %v2067
    %v2069 = vpop.f32.mrb[0].mxu0
    %2070 = vdwg.mxu0
    %v2071 = vadd.f32 %v1878, %v2063
    %v2072 = vadd.f32 %v1879, %v2068
    %v2073 = vld [vmem:[%s12] sm:$0x1]
    %v2074 = vld [vmem:[%s13] sm:$0x1]
    %v2075 = vsel %vm89, %v2071, 0.0
    %2076 = vadd.xlane.f32.xlu0 %v2075
    %v2077 = vpop.xlane.xlu0 %2076
    %v2078 = vsel %vm89, %v2072, 0.0
    %2079 = vadd.xlane.f32.xlu0 %v2078
    %v2080 = vpop.xlane.xlu0 %2079
    %v2081 = vmul.f32 %v2077, %v1843
    %v2082 = vmul.f32 %v2080, %v1843
    %v2083 = vsub.f32 %v2071, %v2081
    %v2084 = vsub.f32 %v2072, %v2082
    %v2085 = vmul.f32 %v2083, %v2083
    %v2086 = vmul.f32 %v2084, %v2084
    %v2087 = vsel %vm89, %v2085, 0.0
    %2088 = vadd.xlane.f32.xlu0 %v2087
    %v2089 = vpop.xlane.xlu0 %2088
    %v2090 = vsel %vm89, %v2086, 0.0
    %2091 = vadd.xlane.f32.xlu0 %v2090
    %v2092 = vpop.xlane.xlu0 %2091
    %v2093 = vmul.f32 %v2089, %v1843
    %v2094 = vmul.f32 %v2092, %v1843
    %v2095 = vadd.f32 %v2093, 1e-05
    %v2096 = vadd.f32 %v2094, 1e-05
    %v2097 = vrsqrt.pop %v2095
    %v2098 = vrsqrt.pop %v2096
    %v2099 = vmul.f32 %v2083, %v2097
    %v2100 = vmul.f32 %v2084, %v2098
    %v2102 = vlaneseq
    %v2103 = vshrl.u32 %v2102, 7
    %v2104 = vsub.s32 0, %v2103
    %v2105 = vrot.slane %v2073, %v2104
    %v2107 = vmul.f32 %v2099, %v2105
    %v2108 = vmul.f32 %v2100, %v2105
    %v2110 = vlaneseq
    %v2111 = vshrl.u32 %v2110, 7
    %v2112 = vsub.s32 0, %v2111
    %v2113 = vrot.slane %v2074, %v2112
    %v2115 = vadd.f32 %v2107, %v2113
    %v2116 = vadd.f32 %v2108, %v2113
    %2117 = vst.msk [vmem:[#allocation7] sm:$0xff] %vm89, %v2115
    %2118 = vst.msk [vmem:[#allocation7 + $0x8] sm:$0xff] %vm89, %v2116
    // Predicated region
    $region66: #{tpu_custom_call.1} parent=1 // pred_check
      _
    $region67: #{tpu_custom_call.1} parent=1 // pred_check_branch
      %2120 = sbr.rel (0) target = $region69
    $region68: #{tpu_custom_call.1} parent=1 // pred_region
      %s2122 = ssub.s32 256, 256
      %2123 = vsyncadd [#allocation4], %s2122
      %s2124 = sshll.u32 [#allocation7], 4
      %s2125 = int_to_ptr.vmem [resolvable:$true] %s2124
      %2130 = dma.vmem_to_hbm [thread:$0]  %s2125, 256, %s14, [#allocation4], 128, 128, 8
    $region69: #{tpu_custom_call.1} parent=1 // pred_fallthru
      _
    // Predicated region
    $region70: #{tpu_custom_call.1} parent=1 // pred_check
      _
    $region71: #{tpu_custom_call.1} parent=1 // pred_check_branch
      %2132 = sbr.rel (0) target = $region73
    $region72: #{tpu_custom_call.1} parent=1 // pred_region
      %2133 = dma.done [#allocation4], 256
    $region73: #{tpu_custom_call.1} parent=1 // pred_fallthru
      _
    %2134 = vsyncpa [#allocation3], 1
    %2135 = vsyncpa [#allocation6], 1
    %2136 = vsyncpa [#allocation4], 1

</llo_original>
